<compile_context>
chip_gen: v7x
topology: tpu7x:2x2x1
jax: 0.10.0
libtpu: 0.0.40
codegen_flags: <defaults>
</compile_context>

<pallas_src>
import jax
import jax.numpy as jnp
from jax.experimental import pallas as pl
from jax.experimental.pallas import tpu as pltpu


def residual_block_kernel(x_ref, w1_ref, b1_ref, w2_ref, b2_ref,
                          wsk_ref, bsk_ref, rh_ref, out_ref):
    # x_ref:  (H+2, (W+2)*Cin)   padded input image, channels fastest on lanes
    # w1_ref: (3, (W+2)*Cin, W*Cout)  conv1 weight slabs (BN1 scale folded, W-taps banded)
    # w2_ref: (3, W*Cout,  W*Cout)    conv2 weight slabs (BN2 scale folded, W-taps banded)
    # wsk_ref:((W+2)*Cin, W*Cout)     1x1-skip weight slab (BN scale folded)
    # b*_ref: (1, W*Cout)             folded BN biases, tiled over W
    # rh_ref: (3, H, H)               exact row-shift matrices (zero-padded shift in H)
    # out_ref:(H, W*Cout)
    H = x_ref.shape[0] - 2
    WCo = out_ref.shape[1]

    # ---- conv1 (+BN1 folded) + ReLU: 3 lane-dense MXU matmuls over padded row bands
    acc1 = jnp.zeros((H, WCo), jnp.float32)
    for i in range(3):
        acc1 = acc1 + jnp.dot(x_ref[i:i + H, :], w1_ref[i],
                              preferred_element_type=jnp.float32)
    out1 = jnp.maximum(acc1 + b1_ref[...], 0.0)          # (H, W*Cout), stays in vregs

    # ---- conv2 (+BN2 folded): H-shift via tiny exact (H,H) matmuls, W-taps in slabs
    acc2 = jnp.zeros((H, WCo), jnp.float32)
    for i in range(3):
        if i == 1:
            src = out1
        else:
            src = jnp.dot(rh_ref[i], out1, preferred_element_type=jnp.float32)
        acc2 = acc2 + jnp.dot(src, w2_ref[i], preferred_element_type=jnp.float32)

    # ---- skip path: 1x1 conv + BN (identity slab when no projection)
    skip = jnp.dot(x_ref[1:1 + H, :], wsk_ref[...], preferred_element_type=jnp.float32)

    out = jnp.maximum(acc2 + b2_ref[...] + skip + bsk_ref[...], 0.0)
    out_ref[...] = out.astype(out_ref.dtype)


def residual_block_pallas(x_nchw, p, eps=1e-5):
    N, Cin, H, W = x_nchw.shape
    Cout = p['w1'].shape[0]
    f32 = jnp.float32

    # NCHW -> NHWC -> pad H,W by 1 -> flatten (W+2)*Cin onto the lane axis
    x = jnp.transpose(x_nchw, (0, 2, 3, 1)).astype(f32)
    x_pad = jnp.pad(x, ((0, 0), (1, 1), (1, 1), (0, 0)))
    x_slab = x_pad.reshape(N, H + 2, (W + 2) * Cin)

    def fold(g, b, m, v):
        s = (g / jnp.sqrt(v + eps)).astype(f32)
        return s, (b - m * s).astype(f32)

    s1, c1 = fold(p['g1'], p['b1'], p['m1'], p['v1'])
    s2, c2 = fold(p['g2'], p['b2'], p['m2'], p['v2'])
    if p.get('wsk') is not None:                          # projection skip
        ssk, csk = fold(p['gs'], p['bs'], p['ms'], p['vs'])
        wsk2d = (p['wsk'][:, :, 0, 0] * ssk[:, None]).astype(f32)   # (Cout, Cin)
    else:                                                 # identity skip (Cin == Cout)
        wsk2d = jnp.eye(Cout, dtype=f32)
        csk = jnp.zeros((Cout,), f32)

    # Fold BN scale into conv weights (per output channel)
    w1s = (p['w1'] * s1[:, None, None, None]).astype(f32)  # (Cout, Cin, 3, 3)
    w2s = (p['w2'] * s2[:, None, None, None]).astype(f32)  # (Cout, Cout, 3, 3)

    # Banded weight slabs: fold the W-direction (kw) taps into the weight matrix.
    eyeW = jnp.eye(W, dtype=f32)
    S1 = [jnp.pad(eyeW, ((j, 2 - j), (0, 0))) for j in range(3)]   # (W+2, W): picks col w+j
    S2 = [jnp.eye(W, k=1 - j, dtype=f32) for j in range(3)]        # (W, W): picks col w+j-1 (zero-pad)

    W1big = jnp.stack([sum(jnp.kron(S1[j], w1s[:, :, i, j].T) for j in range(3))
                       for i in range(3)])                # (3, (W+2)*Cin, W*Cout)
    W2big = jnp.stack([sum(jnp.kron(S2[j], w2s[:, :, i, j].T) for j in range(3))
                       for i in range(3)])                # (3, W*Cout, W*Cout)
    Wskbig = jnp.kron(S1[1], wsk2d.T)                     # ((W+2)*Cin, W*Cout)

    # Folded BN biases, tiled to the lane-dense W*Cout layout
    b1row = jnp.tile(c1, W)[None, :]
    b2row = jnp.tile(c2, W)[None, :]
    bskrow = jnp.tile(csk, W)[None, :]

    # Exact zero-padded row shifts for conv2's kh taps (done as tiny MXU matmuls)
    RH = jnp.stack([jnp.eye(H, k=i - 1, dtype=f32) for i in range(3)])   # (3, H, H)

    WCi = (W + 2) * Cin
    WCo = W * Cout

    out_slab = pl.pallas_call(
        residual_block_kernel,
        out_shape=jax.ShapeDtypeStruct((N, H, WCo), x_nchw.dtype),
        grid=(N,),
        in_specs=[
            pl.BlockSpec((None, H + 2, WCi), lambda n: (n, 0, 0)),   # x slab (per image)
            pl.BlockSpec((3, WCi, WCo), lambda n: (0, 0, 0)),        # W1big
            pl.BlockSpec((1, WCo), lambda n: (0, 0)),                # b1
            pl.BlockSpec((3, WCo, WCo), lambda n: (0, 0, 0)),        # W2big
            pl.BlockSpec((1, WCo), lambda n: (0, 0)),                # b2
            pl.BlockSpec((WCi, WCo), lambda n: (0, 0)),              # Wskbig
            pl.BlockSpec((1, WCo), lambda n: (0, 0)),                # bsk
            pl.BlockSpec((3, H, H), lambda n: (0, 0, 0)),            # row-shift mats
        ],
        out_specs=pl.BlockSpec((None, H, WCo), lambda n: (n, 0, 0)),
        compiler_params=pltpu.CompilerParams(dimension_semantics=("parallel",)),
    )(x_slab, W1big, b1row, W2big, b2row, Wskbig, bskrow, RH)

    out = out_slab.reshape(N, H, W, Cout)                 # lane-dense slab -> NHWC
    return jnp.transpose(out, (0, 3, 1, 2))               # -> NCHW


def reference_forward(x, p, eps=1e-5):
    """Pure-JAX NCHW reference matching the PyTorch module (eval-mode BN)."""
    def conv2d(x, w, stride, pad):
        return jax.lax.conv_general_dilated(
            x, w, window_strides=(stride, stride),
            padding=((pad, pad), (pad, pad)),
            dimension_numbers=('NCHW', 'OIHW', 'NCHW'))

    def bn(x, g, b, m, v):
        inv = 1.0 / jnp.sqrt(v + eps)
        return (x - m[None, :, None, None]) * (g * inv)[None, :, None, None] \
            + b[None, :, None, None]

    out = jax.nn.relu(bn(conv2d(x, p['w1'], 1, 1), p['g1'], p['b1'], p['m1'], p['v1']))
    out = bn(conv2d(out, p['w2'], 1, 1), p['g2'], p['b2'], p['m2'], p['v2'])
    skip = bn(conv2d(x, p['wsk'], 1, 0), p['gs'], p['bs'], p['ms'], p['vs'])
    return jax.nn.relu(out + skip)


if __name__ == "__main__":
    N, Cin, Cout, H, W = 2, 4, 8, 16, 16   # stride=1, Cin != Cout -> projection skip
    key = jax.random.PRNGKey(0)
    ks = jax.random.split(key, 17)

    p = {
        'w1': 0.1 * jax.random.normal(ks[0], (Cout, Cin, 3, 3), jnp.float32),
        'g1': 1.0 + 0.1 * jax.random.normal(ks[1], (Cout,), jnp.float32),
        'b1': 0.1 * jax.random.normal(ks[2], (Cout,), jnp.float32),
        'm1': 0.1 * jax.random.normal(ks[3], (Cout,), jnp.float32),
        'v1': 0.5 + jax.random.uniform(ks[4], (Cout,), jnp.float32),
        'w2': 0.1 * jax.random.normal(ks[5], (Cout, Cout, 3, 3), jnp.float32),
        'g2': 1.0 + 0.1 * jax.random.normal(ks[6], (Cout,), jnp.float32),
        'b2': 0.1 * jax.random.normal(ks[7], (Cout,), jnp.float32),
        'm2': 0.1 * jax.random.normal(ks[8], (Cout,), jnp.float32),
        'v2': 0.5 + jax.random.uniform(ks[9], (Cout,), jnp.float32),
        'wsk': 0.1 * jax.random.normal(ks[10], (Cout, Cin, 1, 1), jnp.float32),
        'gs': 1.0 + 0.1 * jax.random.normal(ks[11], (Cout,), jnp.float32),
        'bs': 0.1 * jax.random.normal(ks[12], (Cout,), jnp.float32),
        'ms': 0.1 * jax.random.normal(ks[13], (Cout,), jnp.float32),
        'vs': 0.5 + jax.random.uniform(ks[14], (Cout,), jnp.float32),
    }

    x = jax.random.normal(ks[16], (N, Cin, H, W), jnp.float32)

    out = residual_block_pallas(x, p)
    out = jax.block_until_ready(out)

    ref = reference_forward(x, p)
    max_err = float(jnp.max(jnp.abs(out - ref)))
    assert out.shape == (N, Cout, H, W), out.shape
    assert jnp.allclose(out, ref, atol=1e-4, rtol=1e-4), f"max_err={max_err}"

    print("KERNEL_OK")
</pallas_src>

<mosaic_0001>
module attributes {stable_mosaic.version = 11 : i64} {
  func.func @residual_block_kernel(%arg0: i32, %arg1: memref<1x18x72xf32, #tpu.memory_space<vmem>>, %arg2: memref<3x72x128xf32, #tpu.memory_space<vmem>>, %arg3: memref<1x128xf32, #tpu.memory_space<vmem>>, %arg4: memref<3x128x128xf32, #tpu.memory_space<vmem>>, %arg5: memref<1x128xf32, #tpu.memory_space<vmem>>, %arg6: memref<72x128xf32, #tpu.memory_space<vmem>>, %arg7: memref<1x128xf32, #tpu.memory_space<vmem>>, %arg8: memref<3x16x16xf32, #tpu.memory_space<vmem>>, %arg9: memref<1x16x128xf32, #tpu.memory_space<vmem>>) attributes {dimension_semantics = [#tpu.dimension_semantics<parallel>], iteration_bounds = array<i64: 2>, scalar_prefetch = 0 : i64, scratch_operands = 0 : i64, tpu.core_type = #tpu.core_type<tc>, window_params = [{transform_indices = @transform_0, window_bounds = array<i64: 1, 18, 72>}, {pipeline_mode = #tpu.pipeline_mode<synchronous>, transform_indices = @transform_1, window_bounds = array<i64: 3, 72, 128>}, {pipeline_mode = #tpu.pipeline_mode<synchronous>, transform_indices = @transform_2, window_bounds = array<i64: 1, 128>}, {pipeline_mode = #tpu.pipeline_mode<synchronous>, transform_indices = @transform_3, window_bounds = array<i64: 3, 128, 128>}, {pipeline_mode = #tpu.pipeline_mode<synchronous>, transform_indices = @transform_4, window_bounds = array<i64: 1, 128>}, {pipeline_mode = #tpu.pipeline_mode<synchronous>, transform_indices = @transform_5, window_bounds = array<i64: 72, 128>}, {pipeline_mode = #tpu.pipeline_mode<synchronous>, transform_indices = @transform_6, window_bounds = array<i64: 1, 128>}, {pipeline_mode = #tpu.pipeline_mode<synchronous>, transform_indices = @transform_7, window_bounds = array<i64: 3, 16, 16>}, {transform_indices = @transform_8, window_bounds = array<i64: 1, 16, 128>}]} {
    %cst = arith.constant 0.000000e+00 : f32
    %0 = vector.broadcast %cst : f32 to vector<16x128xf32>
    %c0 = arith.constant 0 : index
    %c0_0 = arith.constant 0 : index
    %c0_1 = arith.constant 0 : index
    %1 = vector.load %arg1[%c0, %c0_0, %c0_1] : memref<1x18x72xf32, #tpu.memory_space<vmem>>, vector<1x16x72xf32>
    %2 = vector.shape_cast %1 : vector<1x16x72xf32> to vector<16x72xf32>
    %c0_2 = arith.constant 0 : index
    %c0_3 = arith.constant 0 : index
    %c0_4 = arith.constant 0 : index
    %3 = vector.load %arg2[%c0_2, %c0_3, %c0_4] : memref<3x72x128xf32, #tpu.memory_space<vmem>>, vector<1x72x128xf32>
    %4 = vector.shape_cast %3 : vector<1x72x128xf32> to vector<72x128xf32>
    %cst_5 = arith.constant dense<0.000000e+00> : vector<16x128xf32>
    %5 = tpu.matmul %2, %4, %cst_5 {dimension_numbers = #tpu.dot_dimension_numbers<[1], [0], [0], [1], [0, 0, 1, 1], [], []>} : vector<16x72xf32>, vector<72x128xf32>, vector<16x128xf32> -> vector<16x128xf32>
    %6 = arith.addf %0, %5 : vector<16x128xf32>
    %c0_6 = arith.constant 0 : index
    %c1 = arith.constant 1 : index
    %c0_7 = arith.constant 0 : index
    %7 = vector.load %arg1[%c0_6, %c1, %c0_7] : memref<1x18x72xf32, #tpu.memory_space<vmem>>, vector<1x16x72xf32>
    %8 = vector.shape_cast %7 : vector<1x16x72xf32> to vector<16x72xf32>
    %c1_8 = arith.constant 1 : index
    %c0_9 = arith.constant 0 : index
    %c0_10 = arith.constant 0 : index
    %9 = vector.load %arg2[%c1_8, %c0_9, %c0_10] : memref<3x72x128xf32, #tpu.memory_space<vmem>>, vector<1x72x128xf32>
    %10 = vector.shape_cast %9 : vector<1x72x128xf32> to vector<72x128xf32>
    %cst_11 = arith.constant dense<0.000000e+00> : vector<16x128xf32>
    %11 = tpu.matmul %8, %10, %cst_11 {dimension_numbers = #tpu.dot_dimension_numbers<[1], [0], [0], [1], [0, 0, 1, 1], [], []>} : vector<16x72xf32>, vector<72x128xf32>, vector<16x128xf32> -> vector<16x128xf32>
    %12 = arith.addf %6, %11 : vector<16x128xf32>
    %c0_12 = arith.constant 0 : index
    %c2 = arith.constant 2 : index
    %c0_13 = arith.constant 0 : index
    %13 = vector.load %arg1[%c0_12, %c2, %c0_13] : memref<1x18x72xf32, #tpu.memory_space<vmem>>, vector<1x16x72xf32>
    %14 = vector.shape_cast %13 : vector<1x16x72xf32> to vector<16x72xf32>
    %c2_14 = arith.constant 2 : index
    %c0_15 = arith.constant 0 : index
    %c0_16 = arith.constant 0 : index
    %15 = vector.load %arg2[%c2_14, %c0_15, %c0_16] : memref<3x72x128xf32, #tpu.memory_space<vmem>>, vector<1x72x128xf32>
    %16 = vector.shape_cast %15 : vector<1x72x128xf32> to vector<72x128xf32>
    %cst_17 = arith.constant dense<0.000000e+00> : vector<16x128xf32>
    %17 = tpu.matmul %14, %16, %cst_17 {dimension_numbers = #tpu.dot_dimension_numbers<[1], [0], [0], [1], [0, 0, 1, 1], [], []>} : vector<16x72xf32>, vector<72x128xf32>, vector<16x128xf32> -> vector<16x128xf32>
    %18 = arith.addf %12, %17 : vector<16x128xf32>
    %c0_18 = arith.constant 0 : index
    %c0_19 = arith.constant 0 : index
    %19 = vector.load %arg3[%c0_18, %c0_19] : memref<1x128xf32, #tpu.memory_space<vmem>>, vector<1x128xf32>
    %20 = vector.broadcast %19 : vector<1x128xf32> to vector<16x128xf32>
    %21 = arith.addf %18, %20 : vector<16x128xf32>
    %cst_20 = arith.constant 0.000000e+00 : f32
    %22 = vector.broadcast %cst_20 : f32 to vector<16x128xf32>
    %23 = arith.maximumf %21, %22 : vector<16x128xf32>
    %cst_21 = arith.constant 0.000000e+00 : f32
    %24 = vector.broadcast %cst_21 : f32 to vector<16x128xf32>
    %c0_22 = arith.constant 0 : index
    %c0_23 = arith.constant 0 : index
    %c0_24 = arith.constant 0 : index
    %25 = vector.load %arg8[%c0_22, %c0_23, %c0_24] : memref<3x16x16xf32, #tpu.memory_space<vmem>>, vector<1x16x16xf32>
    %26 = vector.shape_cast %25 : vector<1x16x16xf32> to vector<16x16xf32>
    %cst_25 = arith.constant dense<0.000000e+00> : vector<16x128xf32>
    %27 = tpu.matmul %26, %23, %cst_25 {dimension_numbers = #tpu.dot_dimension_numbers<[1], [0], [0], [1], [0, 0, 1, 1], [], []>} : vector<16x16xf32>, vector<16x128xf32>, vector<16x128xf32> -> vector<16x128xf32>
    %c0_26 = arith.constant 0 : index
    %c0_27 = arith.constant 0 : index
    %c0_28 = arith.constant 0 : index
    %28 = vector.load %arg4[%c0_26, %c0_27, %c0_28] : memref<3x128x128xf32, #tpu.memory_space<vmem>>, vector<1x128x128xf32>
    %29 = vector.shape_cast %28 : vector<1x128x128xf32> to vector<128x128xf32>
    %cst_29 = arith.constant dense<0.000000e+00> : vector<16x128xf32>
    %30 = tpu.matmul %27, %29, %cst_29 {dimension_numbers = #tpu.dot_dimension_numbers<[1], [0], [0], [1], [0, 0, 1, 1], [], []>} : vector<16x128xf32>, vector<128x128xf32>, vector<16x128xf32> -> vector<16x128xf32>
    %31 = arith.addf %24, %30 : vector<16x128xf32>
    %c1_30 = arith.constant 1 : index
    %c0_31 = arith.constant 0 : index
    %c0_32 = arith.constant 0 : index
    %32 = vector.load %arg4[%c1_30, %c0_31, %c0_32] : memref<3x128x128xf32, #tpu.memory_space<vmem>>, vector<1x128x128xf32>
    %33 = vector.shape_cast %32 : vector<1x128x128xf32> to vector<128x128xf32>
    %cst_33 = arith.constant dense<0.000000e+00> : vector<16x128xf32>
    %34 = tpu.matmul %23, %33, %cst_33 {dimension_numbers = #tpu.dot_dimension_numbers<[1], [0], [0], [1], [0, 0, 1, 1], [], []>} : vector<16x128xf32>, vector<128x128xf32>, vector<16x128xf32> -> vector<16x128xf32>
    %35 = arith.addf %31, %34 : vector<16x128xf32>
    %c2_34 = arith.constant 2 : index
    %c0_35 = arith.constant 0 : index
    %c0_36 = arith.constant 0 : index
    %36 = vector.load %arg8[%c2_34, %c0_35, %c0_36] : memref<3x16x16xf32, #tpu.memory_space<vmem>>, vector<1x16x16xf32>
    %37 = vector.shape_cast %36 : vector<1x16x16xf32> to vector<16x16xf32>
    %cst_37 = arith.constant dense<0.000000e+00> : vector<16x128xf32>
    %38 = tpu.matmul %37, %23, %cst_37 {dimension_numbers = #tpu.dot_dimension_numbers<[1], [0], [0], [1], [0, 0, 1, 1], [], []>} : vector<16x16xf32>, vector<16x128xf32>, vector<16x128xf32> -> vector<16x128xf32>
    %c2_38 = arith.constant 2 : index
    %c0_39 = arith.constant 0 : index
    %c0_40 = arith.constant 0 : index
    %39 = vector.load %arg4[%c2_38, %c0_39, %c0_40] : memref<3x128x128xf32, #tpu.memory_space<vmem>>, vector<1x128x128xf32>
    %40 = vector.shape_cast %39 : vector<1x128x128xf32> to vector<128x128xf32>
    %cst_41 = arith.constant dense<0.000000e+00> : vector<16x128xf32>
    %41 = tpu.matmul %38, %40, %cst_41 {dimension_numbers = #tpu.dot_dimension_numbers<[1], [0], [0], [1], [0, 0, 1, 1], [], []>} : vector<16x128xf32>, vector<128x128xf32>, vector<16x128xf32> -> vector<16x128xf32>
    %42 = arith.addf %35, %41 : vector<16x128xf32>
    %c0_42 = arith.constant 0 : index
    %c1_43 = arith.constant 1 : index
    %c0_44 = arith.constant 0 : index
    %43 = vector.load %arg1[%c0_42, %c1_43, %c0_44] : memref<1x18x72xf32, #tpu.memory_space<vmem>>, vector<1x16x72xf32>
    %44 = vector.shape_cast %43 : vector<1x16x72xf32> to vector<16x72xf32>
    %c0_45 = arith.constant 0 : index
    %c0_46 = arith.constant 0 : index
    %45 = vector.load %arg6[%c0_45, %c0_46] : memref<72x128xf32, #tpu.memory_space<vmem>>, vector<72x128xf32>
    %cst_47 = arith.constant dense<0.000000e+00> : vector<16x128xf32>
    %46 = tpu.matmul %44, %45, %cst_47 {dimension_numbers = #tpu.dot_dimension_numbers<[1], [0], [0], [1], [0, 0, 1, 1], [], []>} : vector<16x72xf32>, vector<72x128xf32>, vector<16x128xf32> -> vector<16x128xf32>
    %c0_48 = arith.constant 0 : index
    %c0_49 = arith.constant 0 : index
    %47 = vector.load %arg5[%c0_48, %c0_49] : memref<1x128xf32, #tpu.memory_space<vmem>>, vector<1x128xf32>
    %48 = vector.broadcast %47 : vector<1x128xf32> to vector<16x128xf32>
    %49 = arith.addf %42, %48 : vector<16x128xf32>
    %50 = arith.addf %49, %46 : vector<16x128xf32>
    %c0_50 = arith.constant 0 : index
    %c0_51 = arith.constant 0 : index
    %51 = vector.load %arg7[%c0_50, %c0_51] : memref<1x128xf32, #tpu.memory_space<vmem>>, vector<1x128xf32>
    %52 = vector.broadcast %51 : vector<1x128xf32> to vector<16x128xf32>
    %53 = arith.addf %50, %52 : vector<16x128xf32>
    %cst_52 = arith.constant 0.000000e+00 : f32
    %54 = vector.broadcast %cst_52 : f32 to vector<16x128xf32>
    %55 = arith.maximumf %53, %54 : vector<16x128xf32>
    %c0_53 = arith.constant 0 : index
    %c0_54 = arith.constant 0 : index
    %c0_55 = arith.constant 0 : index
    %56 = vector.load %arg9[%c0_53, %c0_54, %c0_55] : memref<1x16x128xf32, #tpu.memory_space<vmem>>, vector<1x16x128xf32>
    %57 = vector.shape_cast %56 : vector<1x16x128xf32> to vector<16x128xf32>
    %58 = vector.shape_cast %55 : vector<16x128xf32> to vector<1x16x128xf32>
    tpu.vector_store %arg9[%c0_53, %c0_54, %c0_55], %58 {strides = array<i32>} : memref<1x16x128xf32, #tpu.memory_space<vmem>>, vector<1x16x128xf32>,
    return
  }
  func.func @transform_0(%arg0: i32) -> (i32, i32, i32) {
    %c0_i32 = arith.constant 0 : i32
    %c0_i32_0 = arith.constant 0 : i32
    %c0_i32_1 = arith.constant 0 : i32
    return %arg0, %c0_i32, %c0_i32_0 : i32, i32, i32
  }
  func.func @transform_1(%arg0: i32) -> (i32, i32, i32) {
    %c0_i32 = arith.constant 0 : i32
    %c0_i32_0 = arith.constant 0 : i32
    %c0_i32_1 = arith.constant 0 : i32
    %c0_i32_2 = arith.constant 0 : i32
    return %c0_i32, %c0_i32_0, %c0_i32_1 : i32, i32, i32
  }
  func.func @transform_2(%arg0: i32) -> (i32, i32) {
    %c0_i32 = arith.constant 0 : i32
    %c0_i32_0 = arith.constant 0 : i32
    %c0_i32_1 = arith.constant 0 : i32
    return %c0_i32, %c0_i32_0 : i32, i32
  }
  func.func @transform_3(%arg0: i32) -> (i32, i32, i32) {
    %c0_i32 = arith.constant 0 : i32
    %c0_i32_0 = arith.constant 0 : i32
    %c0_i32_1 = arith.constant 0 : i32
    %c0_i32_2 = arith.constant 0 : i32
    return %c0_i32, %c0_i32_0, %c0_i32_1 : i32, i32, i32
  }
  func.func @transform_4(%arg0: i32) -> (i32, i32) {
    %c0_i32 = arith.constant 0 : i32
    %c0_i32_0 = arith.constant 0 : i32
    %c0_i32_1 = arith.constant 0 : i32
    return %c0_i32, %c0_i32_0 : i32, i32
  }
  func.func @transform_5(%arg0: i32) -> (i32, i32) {
    %c0_i32 = arith.constant 0 : i32
    %c0_i32_0 = arith.constant 0 : i32
    %c0_i32_1 = arith.constant 0 : i32
    return %c0_i32, %c0_i32_0 : i32, i32
  }
  func.func @transform_6(%arg0: i32) -> (i32, i32) {
    %c0_i32 = arith.constant 0 : i32
    %c0_i32_0 = arith.constant 0 : i32
    %c0_i32_1 = arith.constant 0 : i32
    return %c0_i32, %c0_i32_0 : i32, i32
  }
  func.func @transform_7(%arg0: i32) -> (i32, i32, i32) {
    %c0_i32 = arith.constant 0 : i32
    %c0_i32_0 = arith.constant 0 : i32
    %c0_i32_1 = arith.constant 0 : i32
    %c0_i32_2 = arith.constant 0 : i32
    return %c0_i32, %c0_i32_0, %c0_i32_1 : i32, i32, i32
  }
  func.func @transform_8(%arg0: i32) -> (i32, i32, i32) {
    %c0_i32 = arith.constant 0 : i32
    %c0_i32_0 = arith.constant 0 : i32
    %c0_i32_1 = arith.constant 0 : i32
    return %arg0, %c0_i32, %c0_i32_0 : i32, i32, i32
  }
}

</mosaic_0001>

<llo_original>
// kernel: tpu_custom_call.1
$region0: #{tpu_custom_call.1}
  #allocation0 [shape = 'u32[]', space=smem, size = 0x4, offset = 0x4, fixed_abs, tag = 'smem constant byte address 0x4 - core index']
  #allocation1 [shape = 'u32[144,128]{1,0:T(1,128)}', space=vmem, size = 0x12000, scoped, tag = 'internal scratch']
  %s0 = inlined_call_operand.vmem [shape: f32[2,18,72], index: 0, kind: input, shape index: {}]
  %s1 = inlined_call_operand.hbm [shape: f32[3,72,128], index: 1, kind: input, shape index: {}]
  %s2 = inlined_call_operand.vmem [shape: f32[1,128], index: 2, kind: input, shape index: {}]
  %s3 = inlined_call_operand.hbm [shape: f32[3,128,128], index: 3, kind: input, shape index: {}]
  %s4 = inlined_call_operand.vmem [shape: f32[1,128], index: 4, kind: input, shape index: {}]
  %s5 = inlined_call_operand.vmem [shape: f32[72,128], index: 5, kind: input, shape index: {}]
  %s6 = inlined_call_operand.vmem [shape: f32[1,128], index: 6, kind: input, shape index: {}]
  %s7 = inlined_call_operand.hbm [shape: f32[3,16,16], index: 7, kind: input, shape index: {}]
  %s8 = inlined_call_operand.hbm [shape: f32[2,16,128], index: 8, kind: output, shape index: {}]
  %s9 = sld [smem:[#allocation0]]
  $region77: #{tpu_custom_call.1} parent=0
    _
  %s11 = ssub.s32 1, %s9
  %s12 = scalar_select 0, %s11, %s9
  $region1: #{tpu_custom_call.1} parent=0
    #allocation2 [shape = 'u8[110592]{0}', space=vmem, size = 0x1b000, scoped, tag = 'input window, operand 1, single buffered']
    #allocation3 [shape = 's32[2]{0}', space=sflag, size = 0x8, scoped, tag = 'scoped memory for tpu_custom_call.1']
    #allocation4 [shape = 's32[2]{0}', space=sflag, size = 0x8, scoped, tag = 'scoped memory for tpu_custom_call.1']
    #allocation5 [shape = 'u8[196608]{0}', space=vmem, size = 0x30000, scoped, tag = 'input window, operand 3, single buffered']
    #allocation6 [shape = 's32[1]{0}', space=sflag, size = 0x4, scoped, tag = 'scoped memory for tpu_custom_call.1']
    #allocation7 [shape = 'u8[24576]{0}', space=vmem, size = 0x6000, scoped, tag = 'input window, operand 7, single buffered']
    #allocation8 [shape = 'u8[16384]{0}', space=vmem, size = 0x4000, scoped, tag = 'output window, operand 0']
    %13 = vsyncpa [#allocation3], 0
    %14 = vsyncpa [#allocation6], 0
    %15 = vsyncpa [#allocation4], 0
    %s16 = scalar_lea.sflag [#allocation4], 1
    %17 = vsyncpa %s16, 0
    loop: start=0, step=1, limit=4
    $region2: #{tpu_custom_call.1} parent=1 // loop_pre_header
      _
    $region3: #{tpu_custom_call.1} parent=1 // loop_header
      %s19 = sphi 0, %s23
      %p20 = scmp.ge.s32.totalorder %s19, 4
      %s29 = sphi 0, %s31
      %s32 = sphi 0, %s29
      %s33 = sphi 0, %s32
      %s49 = sphi 0, %s33
      %s53 = sphi 0, %s53
      %s55 = sphi 0, %s53
      %s56 = sphi 0, %s55
      %s70 = sphi 0, %s56
      %s74 = sphi 0, %s74
      %s76 = sphi 0, %s74
      %s77 = sphi 0, %s76
      %s91 = sphi 0, %s77
      %s95 = sphi 0, %s95
      %s97 = sphi 0, %s95
      %s98 = sphi 0, %s97
      %s112 = sphi 0, %s98
      %s116 = sphi 0, %s116
      %s118 = sphi 0, %s116
      %s119 = sphi 0, %s118
      %s133 = sphi 0, %s119
      %s137 = sphi 0, %s137
      %s139 = sphi 0, %s137
      %s140 = sphi 0, %s139
      %s154 = sphi 0, %s140
      %s158 = sphi 0, %s158
      %s160 = sphi 0, %s158
      %s161 = sphi 0, %s160
      %s175 = sphi 0, %s161
      %s179 = sphi 0, %s179
      %s181 = sphi 0, %s179
      %s182 = sphi 0, %s181
      %s196 = sphi 0, %s182
      %s202 = sphi 0, %s204
      %s205 = sphi 0, %s202
      %s206 = sphi 0, %s205
      %s222 = sphi 0, %s206
    $region4: #{tpu_custom_call.1} parent=1 // loop_header_branch
      %22 = sbr.rel (%p20) target = $region8
    $region5: #{tpu_custom_call.1} parent=1 // loop_body
      %s24 = ssub.s32 %s19, 1
      %s25 = ssub.s32 %s19, 2
      %s26 = sadd.s32 %s19, 1
      %s27 = ssub.s32 %s19, %s26
      %p28 = scmp.eq.s32.totalorder %s27, 0
      %s30 = sadd.s32 %s29, 1
      %s31 = scalar_select %p28, %s29, %s30
      %p34 = pneg %p28
      %p35 = scmp.eq.s32.totalorder %s19, 1
      %p36 = por %p34, %p35
      %p37 = scmp.ne.s32.totalorder %s29, %s32
      %p38 = scmp.eq.s32.totalorder %s19, 0
      %p39 = por %p37, %p38
      %p40 = scmp.ne.s32.totalorder %s29, %s32
      %p41 = scmp.eq.s32.totalorder %s24, 1
      %p42 = por %p40, %p41
      %p43 = scmp.ne.s32.totalorder %s32, %s33
      %p44 = scmp.eq.s32.totalorder %s24, 0
      %p45 = por %p43, %p44
      %p46 = scmp.ne.s32.totalorder %s32, %s33
      %p47 = scmp.eq.s32.totalorder %s25, 1
      %p48 = por %p46, %p47
      %p50 = scmp.ne.s32.totalorder %s33, %s49
      %p51 = scmp.eq.s32.totalorder %s25, 0
      %p52 = por %p50, %p51
      %s54 = sadd.s32 %s53, 1
      %p57 = scmp.eq.s32.totalorder %s19, 1
      %p58 = scmp.ne.s32.totalorder %s53, %s55
      %p59 = scmp.eq.s32.totalorder %s19, 0
      %p60 = por %p58, %p59
      %p61 = scmp.ne.s32.totalorder %s53, %s55
      %p62 = scmp.eq.s32.totalorder %s24, 1
      %p63 = por %p61, %p62
      %p64 = scmp.ne.s32.totalorder %s55, %s56
      %p65 = scmp.eq.s32.totalorder %s24, 0
      %p66 = por %p64, %p65
      %p67 = scmp.ne.s32.totalorder %s55, %s56
      %p68 = scmp.eq.s32.totalorder %s25, 1
      %p69 = por %p67, %p68
      %p71 = scmp.ne.s32.totalorder %s56, %s70
      %p72 = scmp.eq.s32.totalorder %s25, 0
      %p73 = por %p71, %p72
      %s75 = sadd.s32 %s74, 1
      %p78 = scmp.eq.s32.totalorder %s19, 1
      %p79 = scmp.ne.s32.totalorder %s74, %s76
      %p80 = scmp.eq.s32.totalorder %s19, 0
      %p81 = por %p79, %p80
      %p82 = scmp.ne.s32.totalorder %s74, %s76
      %p83 = scmp.eq.s32.totalorder %s24, 1
      %p84 = por %p82, %p83
      %p85 = scmp.ne.s32.totalorder %s76, %s77
      %p86 = scmp.eq.s32.totalorder %s24, 0
      %p87 = por %p85, %p86
      %p88 = scmp.ne.s32.totalorder %s76, %s77
      %p89 = scmp.eq.s32.totalorder %s25, 1
      %p90 = por %p88, %p89
      %p92 = scmp.ne.s32.totalorder %s77, %s91
      %p93 = scmp.eq.s32.totalorder %s25, 0
      %p94 = por %p92, %p93
      %s96 = sadd.s32 %s95, 1
      %p99 = scmp.eq.s32.totalorder %s19, 1
      %p100 = scmp.ne.s32.totalorder %s95, %s97
      %p101 = scmp.eq.s32.totalorder %s19, 0
      %p102 = por %p100, %p101
      %p103 = scmp.ne.s32.totalorder %s95, %s97
      %p104 = scmp.eq.s32.totalorder %s24, 1
      %p105 = por %p103, %p104
      %p106 = scmp.ne.s32.totalorder %s97, %s98
      %p107 = scmp.eq.s32.totalorder %s24, 0
      %p108 = por %p106, %p107
      %p109 = scmp.ne.s32.totalorder %s97, %s98
      %p110 = scmp.eq.s32.totalorder %s25, 1
      %p111 = por %p109, %p110
      %p113 = scmp.ne.s32.totalorder %s98, %s112
      %p114 = scmp.eq.s32.totalorder %s25, 0
      %p115 = por %p113, %p114
      %s117 = sadd.s32 %s116, 1
      %p120 = scmp.eq.s32.totalorder %s19, 1
      %p121 = scmp.ne.s32.totalorder %s116, %s118
      %p122 = scmp.eq.s32.totalorder %s19, 0
      %p123 = por %p121, %p122
      %p124 = scmp.ne.s32.totalorder %s116, %s118
      %p125 = scmp.eq.s32.totalorder %s24, 1
      %p126 = por %p124, %p125
      %p127 = scmp.ne.s32.totalorder %s118, %s119
      %p128 = scmp.eq.s32.totalorder %s24, 0
      %p129 = por %p127, %p128
      %p130 = scmp.ne.s32.totalorder %s118, %s119
      %p131 = scmp.eq.s32.totalorder %s25, 1
      %p132 = por %p130, %p131
      %p134 = scmp.ne.s32.totalorder %s119, %s133
      %p135 = scmp.eq.s32.totalorder %s25, 0
      %p136 = por %p134, %p135
      %s138 = sadd.s32 %s137, 1
      %p141 = scmp.eq.s32.totalorder %s19, 1
      %p142 = scmp.ne.s32.totalorder %s137, %s139
      %p143 = scmp.eq.s32.totalorder %s19, 0
      %p144 = por %p142, %p143
      %p145 = scmp.ne.s32.totalorder %s137, %s139
      %p146 = scmp.eq.s32.totalorder %s24, 1
      %p147 = por %p145, %p146
      %p148 = scmp.ne.s32.totalorder %s139, %s140
      %p149 = scmp.eq.s32.totalorder %s24, 0
      %p150 = por %p148, %p149
      %p151 = scmp.ne.s32.totalorder %s139, %s140
      %p152 = scmp.eq.s32.totalorder %s25, 1
      %p153 = por %p151, %p152
      %p155 = scmp.ne.s32.totalorder %s140, %s154
      %p156 = scmp.eq.s32.totalorder %s25, 0
      %p157 = por %p155, %p156
      %s159 = sadd.s32 %s158, 1
      %p162 = scmp.eq.s32.totalorder %s19, 1
      %p163 = scmp.ne.s32.totalorder %s158, %s160
      %p164 = scmp.eq.s32.totalorder %s19, 0
      %p165 = por %p163, %p164
      %p166 = scmp.ne.s32.totalorder %s158, %s160
      %p167 = scmp.eq.s32.totalorder %s24, 1
      %p168 = por %p166, %p167
      %p169 = scmp.ne.s32.totalorder %s160, %s161
      %p170 = scmp.eq.s32.totalorder %s24, 0
      %p171 = por %p169, %p170
      %p172 = scmp.ne.s32.totalorder %s160, %s161
      %p173 = scmp.eq.s32.totalorder %s25, 1
      %p174 = por %p172, %p173
      %p176 = scmp.ne.s32.totalorder %s161, %s175
      %p177 = scmp.eq.s32.totalorder %s25, 0
      %p178 = por %p176, %p177
      %s180 = sadd.s32 %s179, 1
      %p183 = scmp.eq.s32.totalorder %s19, 1
      %p184 = scmp.ne.s32.totalorder %s179, %s181
      %p185 = scmp.eq.s32.totalorder %s19, 0
      %p186 = por %p184, %p185
      %p187 = scmp.ne.s32.totalorder %s179, %s181
      %p188 = scmp.eq.s32.totalorder %s24, 1
      %p189 = por %p187, %p188
      %p190 = scmp.ne.s32.totalorder %s181, %s182
      %p191 = scmp.eq.s32.totalorder %s24, 0
      %p192 = por %p190, %p191
      %p193 = scmp.ne.s32.totalorder %s181, %s182
      %p194 = scmp.eq.s32.totalorder %s25, 1
      %p195 = por %p193, %p194
      %p197 = scmp.ne.s32.totalorder %s182, %s196
      %p198 = scmp.eq.s32.totalorder %s25, 0
      %p199 = por %p197, %p198
      %s200 = ssub.s32 %s19, %s26
      %p201 = scmp.eq.s32.totalorder %s200, 0
      %s203 = sadd.s32 %s202, 1
      %s204 = scalar_select %p201, %s202, %s203
      %p207 = pneg %p201
      %p208 = scmp.eq.s32.totalorder %s19, 1
      %p209 = por %p207, %p208
      %p210 = scmp.ne.s32.totalorder %s202, %s205
      %p211 = scmp.eq.s32.totalorder %s19, 0
      %p212 = por %p210, %p211
      %p213 = scmp.ne.s32.totalorder %s202, %s205
      %p214 = scmp.eq.s32.totalorder %s24, 1
      %p215 = por %p213, %p214
      %p216 = scmp.ne.s32.totalorder %s205, %s206
      %p217 = scmp.eq.s32.totalorder %s24, 0
      %p218 = por %p216, %p217
      %p219 = scmp.ne.s32.totalorder %s205, %s206
      %p220 = scmp.eq.s32.totalorder %s25, 1
      %p221 = por %p219, %p220
      %p223 = scmp.ne.s32.totalorder %s206, %s222
      %p224 = scmp.eq.s32.totalorder %s25, 0
      %p225 = por %p223, %p224
      %p226 = scmp.le.s32.totalorder 1, %s19
      %p227 = scmp.lt.s32.totalorder %s19, 3
      %p228 = pnand %p226, %p227
      %p229 = pneg %p228
      // Predicated region
      $region9: #{tpu_custom_call.1} parent=5 // pred_check
        _
      $region10: #{tpu_custom_call.1} parent=5 // pred_check_branch
        %231 = sbr.rel (%p228) target = $region12
      $region11: #{tpu_custom_call.1} parent=5 // pred_region
        %s232 = ssub.s32 %s19, 1
        // Predicated region
        $region13: #{tpu_custom_call.1} parent=11 // pred_check
          %p233 = pneg %p66
        $region14: #{tpu_custom_call.1} parent=11 // pred_check_branch
          %235 = sbr.rel (%p233) target = $region16
        $region15: #{tpu_custom_call.1} parent=11 // pred_region
          %s237 = ssub.s32 3456, 3456
          %238 = vsyncadd [#allocation3], %s237
          %s239 = sshll.u32 [#allocation2], 4
          %s240 = int_to_ptr.vmem [resolvable:$true] %s239
          %245 = dma.hbm_to_vmem [thread:$0]  %s1, 3456, %s240, [#allocation3], 128, 128, 8
        $region16: #{tpu_custom_call.1} parent=11 // pred_fallthru
          _
        // Predicated region
        $region17: #{tpu_custom_call.1} parent=11 // pred_check
          %p246 = pneg %p87
        $region18: #{tpu_custom_call.1} parent=11 // pred_check_branch
          %248 = sbr.rel (%p246) target = $region20
        $region19: #{tpu_custom_call.1} parent=11 // pred_region
          _
        $region20: #{tpu_custom_call.1} parent=11 // pred_fallthru
          _
        // Predicated region
        $region21: #{tpu_custom_call.1} parent=11 // pred_check
          %p249 = pneg %p108
        $region22: #{tpu_custom_call.1} parent=11 // pred_check_branch
          %251 = sbr.rel (%p249) target = $region24
        $region23: #{tpu_custom_call.1} parent=11 // pred_region
          %s253 = ssub.s32 6144, 6144
          %254 = vsyncadd [#allocation6], %s253
          %s255 = sshll.u32 [#allocation5], 4
          %s256 = int_to_ptr.vmem [resolvable:$true] %s255
          %261 = dma.hbm_to_vmem [thread:$0]  %s3, 6144, %s256, [#allocation6], 128, 128, 8
        $region24: #{tpu_custom_call.1} parent=11 // pred_fallthru
          _
        // Predicated region
        $region25: #{tpu_custom_call.1} parent=11 // pred_check
          %p262 = pneg %p129
        $region26: #{tpu_custom_call.1} parent=11 // pred_check_branch
          %264 = sbr.rel (%p262) target = $region28
        $region27: #{tpu_custom_call.1} parent=11 // pred_region
          _
        $region28: #{tpu_custom_call.1} parent=11 // pred_fallthru
          _
        // Predicated region
        $region29: #{tpu_custom_call.1} parent=11 // pred_check
          %p265 = pneg %p150
        $region30: #{tpu_custom_call.1} parent=11 // pred_check_branch
          %267 = sbr.rel (%p265) target = $region32
        $region31: #{tpu_custom_call.1} parent=11 // pred_region
          _
        $region32: #{tpu_custom_call.1} parent=11 // pred_fallthru
          _
        // Predicated region
        $region33: #{tpu_custom_call.1} parent=11 // pred_check
          %p268 = pneg %p171
        $region34: #{tpu_custom_call.1} parent=11 // pred_check_branch
          %270 = sbr.rel (%p268) target = $region36
        $region35: #{tpu_custom_call.1} parent=11 // pred_region
          _
        $region36: #{tpu_custom_call.1} parent=11 // pred_fallthru
          _
        // Predicated region
        $region37: #{tpu_custom_call.1} parent=11 // pred_check
          %p271 = pneg %p192
        $region38: #{tpu_custom_call.1} parent=11 // pred_check_branch
          %273 = sbr.rel (%p271) target = $region40
        $region39: #{tpu_custom_call.1} parent=11 // pred_region
          %s275 = ssub.s32 768, 768
          %276 = vsyncadd [#allocation6], %s275
          %s277 = sshll.u32 [#allocation7], 4
          %s278 = int_to_ptr.vmem [resolvable:$true] %s277
          %283 = dma.hbm_to_vmem [thread:$0]  %s7, 768, %s278, [#allocation6], 128, 128, 8
        $region40: #{tpu_custom_call.1} parent=11 // pred_fallthru
          _
      $region12: #{tpu_custom_call.1} parent=5 // pred_fallthru
        _
      %p284 = scmp.lt.s32.totalorder %s19, 2
      // Predicated region
      $region41: #{tpu_custom_call.1} parent=5 // pred_check
        %p285 = pneg %p284
      $region42: #{tpu_custom_call.1} parent=5 // pred_check_branch
        %287 = sbr.rel (%p285) target = $region44
      $region43: #{tpu_custom_call.1} parent=5 // pred_region
        // Predicated region
        $region45: #{tpu_custom_call.1} parent=43 // pred_check
          %p288 = pneg %p39
        $region46: #{tpu_custom_call.1} parent=43 // pred_check_branch
          %290 = sbr.rel (%p288) target = $region48
        $region47: #{tpu_custom_call.1} parent=43 // pred_region
          %p291 = scmp.lt.s32.totalorder %s19, 1
          %s292 = scalar_select %p291, %s19, 1
          %s293 = smul.addr %s292, 3
          %s294 = smul.addr %s293, 8
          %s295 = scalar_lea.vmem %s0, %s294
        $region48: #{tpu_custom_call.1} parent=43 // pred_fallthru
          _
      $region44: #{tpu_custom_call.1} parent=5 // pred_fallthru
        _
      %p296 = scmp.le.s32.totalorder 1, %s19
      %p297 = scmp.lt.s32.totalorder %s19, 3
      %p298 = pnand %p296, %p297
      %p299 = pneg %p298
      // Predicated region
      $region49: #{tpu_custom_call.1} parent=5 // pred_check
        _
      $region50: #{tpu_custom_call.1} parent=5 // pred_check_branch
        %301 = sbr.rel (%p298) target = $region52
      $region51: #{tpu_custom_call.1} parent=5 // pred_region
        %s302 = ssub.s32 %s19, 1
        // Predicated region
        $region53: #{tpu_custom_call.1} parent=51 // pred_check
          %p303 = pneg %p66
        $region54: #{tpu_custom_call.1} parent=51 // pred_check_branch
          %305 = sbr.rel (%p303) target = $region56
        $region55: #{tpu_custom_call.1} parent=51 // pred_region
          %306 = dma.done [#allocation3], 3456
        $region56: #{tpu_custom_call.1} parent=51 // pred_fallthru
          _
        // Predicated region
        $region57: #{tpu_custom_call.1} parent=51 // pred_check
          %p307 = pneg %p108
        $region58: #{tpu_custom_call.1} parent=51 // pred_check_branch
          %309 = sbr.rel (%p307) target = $region60
        $region59: #{tpu_custom_call.1} parent=51 // pred_region
          %310 = dma.done [#allocation6], 6144
        $region60: #{tpu_custom_call.1} parent=51 // pred_fallthru
          _
        // Predicated region
        $region61: #{tpu_custom_call.1} parent=51 // pred_check
          %p311 = pneg %p192
        $region62: #{tpu_custom_call.1} parent=51 // pred_check_branch
          %313 = sbr.rel (%p311) target = $region64
        $region63: #{tpu_custom_call.1} parent=51 // pred_region
          %314 = dma.done [#allocation6], 768
        $region64: #{tpu_custom_call.1} parent=51 // pred_fallthru
          _
        %p315 = scmp.lt.s32.totalorder %s24, 1
        %s316 = scalar_select %p315, %s24, 1
        %s317 = smul.addr %s316, 3
        %s318 = smul.addr %s317, 8
        %s319 = scalar_lea.vmem %s0, %s318
        %p320 = pneg %p45
        %p321 = pneg %p42
        %p322 = pneg %p66
        %p323 = pneg %p63
        %p324 = pneg %p87
        %p325 = pneg %p84
        %p326 = pneg %p108
        %p327 = pneg %p105
        %p328 = pneg %p129
        %p329 = pneg %p126
        %p330 = pneg %p150
        %p331 = pneg %p147
        %p332 = pneg %p171
        %p333 = pneg %p168
        %p334 = pneg %p192
        %p335 = pneg %p189
        %p336 = pneg %p218
        %p337 = pneg %p215
        %s338 = sand.u32 %s205, 1
        %s339 = scalar_lea.sflag [#allocation4], %s338
        %s340 = sand.u32 %s205, 1
        %s341 = smul.addr %s340, 16
        %s342 = scalar_lea.vmem [#allocation8], %s341
        %p343 = scmp.lt.s32.totalorder %s24, 1
        %s344 = scalar_select %p343, %s24, 1
        %s345 = smul.addr %s344, 3
        %s346 = smul.addr %s345, 8
        %s347 = scalar_lea.vmem %s0, %s346
        %v348 = vld [vmem:[%s347] sm:$0xff]
        %v349 = vld [vmem:[%s347 + $0x8] sm:$0xff]
        %v350 = vld [vmem:[#allocation2] sm:$0xff]
        %v351 = vld [vmem:[#allocation2 + $0x8] sm:$0xff]
        %v352 = vld [vmem:[#allocation2 + $0x10] sm:$0xff]
        %v353 = vld [vmem:[#allocation2 + $0x18] sm:$0xff]
        %v354 = vld [vmem:[#allocation2 + $0x20] sm:$0xff]
        %v355 = vld [vmem:[#allocation2 + $0x28] sm:$0xff]
        %v356 = vld [vmem:[#allocation2 + $0x30] sm:$0xff]
        %v357 = vld [vmem:[#allocation2 + $0x38] sm:$0xff]
        %v358 = vld [vmem:[#allocation2 + $0x40] sm:$0xff]
        %v359 = vld [vmem:[%s347 + $0x1] sm:$0xff]
        %v360 = vld [vmem:[%s347 + $0x9] sm:$0xff]
        %s361 = scalar_lea.vmem [#allocation2], 72
        %v362 = vld [vmem:[%s361] sm:$0xff]
        %v363 = vld [vmem:[%s361 + $0x8] sm:$0xff]
        %v364 = vld [vmem:[%s361 + $0x10] sm:$0xff]
        %v365 = vld [vmem:[%s361 + $0x18] sm:$0xff]
        %v366 = vld [vmem:[%s361 + $0x20] sm:$0xff]
        %v367 = vld [vmem:[%s361 + $0x28] sm:$0xff]
        %v368 = vld [vmem:[%s361 + $0x30] sm:$0xff]
        %v369 = vld [vmem:[%s361 + $0x38] sm:$0xff]
        %v370 = vld [vmem:[%s361 + $0x40] sm:$0xff]
        %vm371 = vcmask 588800
        %v373 = vsel %vm371, %v359, 0
        %v376 = vsel %vm371, %v360, 0
        %378 = vmatprep.subr.mxu0 0.0
        %379 = vmatpush1.msra.mxu0 %v362
        %380 = vmatprep.subr.mxu0 0.0
        %381 = vmatpush1.msra.mxu0 %v363
        %382 = vmatprep.subr.mxu0 0.0
        %383 = vmatpush1.msra.mxu0 %v364
        %384 = vmatprep.subr.mxu0 0.0
        %385 = vmatpush1.msra.mxu0 %v365
        %386 = vmatprep.subr.mxu0 0.0
        %387 = vmatpush1.msra.mxu0 %v366
        %388 = vmatprep.subr.mxu0 0.0
        %389 = vmatpush1.msra.mxu0 %v367
        %390 = vmatprep.subr.mxu0 0.0
        %391 = vmatpush1.msra.mxu0 %v368
        %392 = vmatprep.subr.mxu0 0.0
        %393 = vmatpush1.msra.mxu0 %v369
        %394 = vmatprep.subr.mxu0 0.0
        %395 = vmatpush1.msra.mxu0 %v370
        %396 = vmatprep.subr.mxu0 0.0
        %397 = vmatpush1.msra.mxu0 0.0
        %398 = vmatprep.subr.mxu0 0.0
        %399 = vmatpush1.msra.mxu0 0.0
        %400 = vmatprep.subr.mxu0 0.0
        %401 = vmatpush1.msra.mxu0 0.0
        %402 = vmatprep.subr.mxu0 0.0
        %403 = vmatpush1.msra.mxu0 0.0
        %404 = vmatprep.subr.mxu0 0.0
        %405 = vmatpush1.msra.mxu0 0.0
        %406 = vmatprep.subr.mxu0 0.0
        %407 = vmatpush1.msra.mxu0 0.0
        %408 = vmatprep.subr.mxu0 0.0
        %409 = vmatpush1.msra.mxu0 0.0
        %410 = vmatprep.subr.mxu0 0.0
        %411 = vmatpush1.msra.mxu0 0.0
        %412 = vmatprep.subr.mxu0 0.0
        %413 = vmatpush1.msra.mxu0 0.0
        %414 = vmatprep.subr.mxu0 0.0
        %415 = vmatpush1.msra.mxu0 0.0
        %416 = vmatprep.subr.mxu0 0.0
        %417 = vmatpush1.msra.mxu0 0.0
        %418 = vmatprep.subr.mxu0 0.0
        %419 = vmatpush1.msra.mxu0 0.0
        %420 = vmatprep.subr.mxu0 0.0
        %421 = vmatpush1.msra.mxu0 0.0
        %422 = vmatprep.subr.mxu0 0.0
        %423 = vmatpush1.msra.mxu0 0.0
        %424 = vmatprep.subr.mxu0 0.0
        %425 = vmatpush1.msra.mxu0 0.0
        %426 = vmatprep.subr.mxu0 0.0
        %427 = vmatpush1.msra.mxu0 0.0
        %428 = vmatprep.subr.mxu0 0.0
        %429 = vmatpush1.msra.mxu0 0.0
        %430 = vmatprep.subr.mxu0 0.0
        %431 = vmatpush1.msra.mxu0 0.0
        %432 = vmatprep.subr.mxu0 0.0
        %433 = vmatpush1.msra.mxu0 0.0
        %434 = vmatprep.subr.mxu0 0.0
        %435 = vmatpush1.msra.mxu0 0.0
        %436 = vmatprep.subr.mxu0 0.0
        %437 = vmatpush1.msra.mxu0 0.0
        %438 = vmatprep.subr.mxu0 0.0
        %439 = vmatpush1.msra.mxu0 0.0
        %440 = vmatprep.subr.mxu0 0.0
        %441 = vmatpush1.msra.mxu0 0.0
        %442 = vmatprep.mubr.f32.mxu0 0.0
        %443 = vmatmul.mubr.f32.gmra.mrb[0].mxu0 %v373
        %v444 = vpop.f32.mrb[0].mxu0
        %v445 = vadd.f32 0.0, %v444
        %v446 = vpop.f32.mrb[0].mxu0
        %447 = vmatprep.mubr.f32.mxu0 0.0
        %448 = vmatmul.mubr.f32.gmra.mrb[0].mxu0 %v376
        %v449 = vpop.f32.mrb[0].mxu0
        %v450 = vadd.f32 0.0, %v449
        %v451 = vpop.f32.mrb[0].mxu0
        %452 = vdwg.mxu0
        %v454 = vsel %vm371, %v348, 0
        %v457 = vsel %vm371, %v349, 0
        %459 = vmatprep.subr.mxu0 0.0
        %460 = vmatpush1.msra.mxu0 %v350
        %461 = vmatprep.subr.mxu0 0.0
        %462 = vmatpush1.msra.mxu0 %v351
        %463 = vmatprep.subr.mxu0 0.0
        %464 = vmatpush1.msra.mxu0 %v352
        %465 = vmatprep.subr.mxu0 0.0
        %466 = vmatpush1.msra.mxu0 %v353
        %467 = vmatprep.subr.mxu0 0.0
        %468 = vmatpush1.msra.mxu0 %v354
        %469 = vmatprep.subr.mxu0 0.0
        %470 = vmatpush1.msra.mxu0 %v355
        %471 = vmatprep.subr.mxu0 0.0
        %472 = vmatpush1.msra.mxu0 %v356
        %473 = vmatprep.subr.mxu0 0.0
        %474 = vmatpush1.msra.mxu0 %v357
        %475 = vmatprep.subr.mxu0 0.0
        %476 = vmatpush1.msra.mxu0 %v358
        %477 = vmatprep.subr.mxu0 0.0
        %478 = vmatpush1.msra.mxu0 0.0
        %479 = vmatprep.subr.mxu0 0.0
        %480 = vmatpush1.msra.mxu0 0.0
        %481 = vmatprep.subr.mxu0 0.0
        %482 = vmatpush1.msra.mxu0 0.0
        %483 = vmatprep.subr.mxu0 0.0
        %484 = vmatpush1.msra.mxu0 0.0
        %485 = vmatprep.subr.mxu0 0.0
        %486 = vmatpush1.msra.mxu0 0.0
        %487 = vmatprep.subr.mxu0 0.0
        %488 = vmatpush1.msra.mxu0 0.0
        %489 = vmatprep.subr.mxu0 0.0
        %490 = vmatpush1.msra.mxu0 0.0
        %491 = vmatprep.subr.mxu0 0.0
        %492 = vmatpush1.msra.mxu0 0.0
        %493 = vmatprep.subr.mxu0 0.0
        %494 = vmatpush1.msra.mxu0 0.0
        %495 = vmatprep.subr.mxu0 0.0
        %496 = vmatpush1.msra.mxu0 0.0
        %497 = vmatprep.subr.mxu0 0.0
        %498 = vmatpush1.msra.mxu0 0.0
        %499 = vmatprep.subr.mxu0 0.0
        %500 = vmatpush1.msra.mxu0 0.0
        %501 = vmatprep.subr.mxu0 0.0
        %502 = vmatpush1.msra.mxu0 0.0
        %503 = vmatprep.subr.mxu0 0.0
        %504 = vmatpush1.msra.mxu0 0.0
        %505 = vmatprep.subr.mxu0 0.0
        %506 = vmatpush1.msra.mxu0 0.0
        %507 = vmatprep.subr.mxu0 0.0
        %508 = vmatpush1.msra.mxu0 0.0
        %509 = vmatprep.subr.mxu0 0.0
        %510 = vmatpush1.msra.mxu0 0.0
        %511 = vmatprep.subr.mxu0 0.0
        %512 = vmatpush1.msra.mxu0 0.0
        %513 = vmatprep.subr.mxu0 0.0
        %514 = vmatpush1.msra.mxu0 0.0
        %515 = vmatprep.subr.mxu0 0.0
        %516 = vmatpush1.msra.mxu0 0.0
        %517 = vmatprep.subr.mxu0 0.0
        %518 = vmatpush1.msra.mxu0 0.0
        %519 = vmatprep.subr.mxu0 0.0
        %520 = vmatpush1.msra.mxu0 0.0
        %521 = vmatprep.subr.mxu0 0.0
        %522 = vmatpush1.msra.mxu0 0.0
        %523 = vmatprep.mubr.f32.mxu0 0.0
        %524 = vmatmul.mubr.f32.gmra.mrb[0].mxu0 %v454
        %v525 = vpop.f32.mrb[0].mxu0
        %v526 = vadd.f32 %v445, %v525
        %v527 = vpop.f32.mrb[0].mxu0
        %528 = vmatprep.mubr.f32.mxu0 0.0
        %529 = vmatmul.mubr.f32.gmra.mrb[0].mxu0 %v457
        %v530 = vpop.f32.mrb[0].mxu0
        %v531 = vadd.f32 %v450, %v530
        %v532 = vpop.f32.mrb[0].mxu0
        %533 = vdwg.mxu0
        %v534 = vld [vmem:[%s347 + $0x2] sm:$0xff]
        %v535 = vld [vmem:[%s347 + $0xa] sm:$0xff]
        %s536 = scalar_lea.vmem [#allocation2], 144
        %v537 = vld [vmem:[%s536] sm:$0xff]
        %v538 = vld [vmem:[%s536 + $0x8] sm:$0xff]
        %v539 = vld [vmem:[%s536 + $0x10] sm:$0xff]
        %v540 = vld [vmem:[%s536 + $0x18] sm:$0xff]
        %v541 = vld [vmem:[%s536 + $0x20] sm:$0xff]
        %v542 = vld [vmem:[%s536 + $0x28] sm:$0xff]
        %v543 = vld [vmem:[%s536 + $0x30] sm:$0xff]
        %v544 = vld [vmem:[%s536 + $0x38] sm:$0xff]
        %v545 = vld [vmem:[%s536 + $0x40] sm:$0xff]
        %v547 = vsel %vm371, %v534, 0
        %v550 = vsel %vm371, %v535, 0
        %552 = vmatprep.subr.mxu0 0.0
        %553 = vmatpush1.msra.mxu0 %v537
        %554 = vmatprep.subr.mxu0 0.0
        %555 = vmatpush1.msra.mxu0 %v538
        %556 = vmatprep.subr.mxu0 0.0
        %557 = vmatpush1.msra.mxu0 %v539
        %558 = vmatprep.subr.mxu0 0.0
        %559 = vmatpush1.msra.mxu0 %v540
        %560 = vmatprep.subr.mxu0 0.0
        %561 = vmatpush1.msra.mxu0 %v541
        %562 = vmatprep.subr.mxu0 0.0
        %563 = vmatpush1.msra.mxu0 %v542
        %564 = vmatprep.subr.mxu0 0.0
        %565 = vmatpush1.msra.mxu0 %v543
        %566 = vmatprep.subr.mxu0 0.0
        %567 = vmatpush1.msra.mxu0 %v544
        %568 = vmatprep.subr.mxu0 0.0
        %569 = vmatpush1.msra.mxu0 %v545
        %570 = vmatprep.subr.mxu0 0.0
        %571 = vmatpush1.msra.mxu0 0.0
        %572 = vmatprep.subr.mxu0 0.0
        %573 = vmatpush1.msra.mxu0 0.0
        %574 = vmatprep.subr.mxu0 0.0
        %575 = vmatpush1.msra.mxu0 0.0
        %576 = vmatprep.subr.mxu0 0.0
        %577 = vmatpush1.msra.mxu0 0.0
        %578 = vmatprep.subr.mxu0 0.0
        %579 = vmatpush1.msra.mxu0 0.0
        %580 = vmatprep.subr.mxu0 0.0
        %581 = vmatpush1.msra.mxu0 0.0
        %582 = vmatprep.subr.mxu0 0.0
        %583 = vmatpush1.msra.mxu0 0.0
        %584 = vmatprep.subr.mxu0 0.0
        %585 = vmatpush1.msra.mxu0 0.0
        %586 = vmatprep.subr.mxu0 0.0
        %587 = vmatpush1.msra.mxu0 0.0
        %588 = vmatprep.subr.mxu0 0.0
        %589 = vmatpush1.msra.mxu0 0.0
        %590 = vmatprep.subr.mxu0 0.0
        %591 = vmatpush1.msra.mxu0 0.0
        %592 = vmatprep.subr.mxu0 0.0
        %593 = vmatpush1.msra.mxu0 0.0
        %594 = vmatprep.subr.mxu0 0.0
        %595 = vmatpush1.msra.mxu0 0.0
        %596 = vmatprep.subr.mxu0 0.0
        %597 = vmatpush1.msra.mxu0 0.0
        %598 = vmatprep.subr.mxu0 0.0
        %599 = vmatpush1.msra.mxu0 0.0
        %600 = vmatprep.subr.mxu0 0.0
        %601 = vmatpush1.msra.mxu0 0.0
        %602 = vmatprep.subr.mxu0 0.0
        %603 = vmatpush1.msra.mxu0 0.0
        %604 = vmatprep.subr.mxu0 0.0
        %605 = vmatpush1.msra.mxu0 0.0
        %606 = vmatprep.subr.mxu0 0.0
        %607 = vmatpush1.msra.mxu0 0.0
        %608 = vmatprep.subr.mxu0 0.0
        %609 = vmatpush1.msra.mxu0 0.0
        %610 = vmatprep.subr.mxu0 0.0
        %611 = vmatpush1.msra.mxu0 0.0
        %612 = vmatprep.subr.mxu0 0.0
        %613 = vmatpush1.msra.mxu0 0.0
        %614 = vmatprep.subr.mxu0 0.0
        %615 = vmatpush1.msra.mxu0 0.0
        %616 = vmatprep.mubr.f32.mxu0 0.0
        %617 = vmatmul.mubr.f32.gmra.mrb[0].mxu0 %v547
        %v618 = vpop.f32.mrb[0].mxu0
        %v619 = vadd.f32 0.0, %v618
        %v620 = vpop.f32.mrb[0].mxu0
        %621 = vmatprep.mubr.f32.mxu0 0.0
        %622 = vmatmul.mubr.f32.gmra.mrb[0].mxu0 %v550
        %v623 = vpop.f32.mrb[0].mxu0
        %v624 = vadd.f32 0.0, %v623
        %v625 = vpop.f32.mrb[0].mxu0
        %626 = vdwg.mxu0
        %v627 = vadd.f32 %v526, %v619
        %v628 = vadd.f32 %v531, %v624
        %v629 = vld [vmem:[%s2] sm:$0x1]
        %v631 = vlaneseq
        %v632 = vshrl.u32 %v631, 7
        %v633 = vsub.s32 0, %v632
        %v634 = vrot.slane %v629, %v633
        %v636 = vadd.f32 %v627, %v634
        %v637 = vadd.f32 %v628, %v634
        %v638 = vmax.f32 %v636, 0.0
        %v639 = vmax.f32 %v637, 0.0
        %v640 = vld [vmem:[#allocation7] sm:$0xff]
        %v641 = vld [vmem:[#allocation7 + $0x8] sm:$0xff]
        %vm642 = vcmask 130048
        %v644 = vsel %vm642, %v640, 0
        %v647 = vsel %vm642, %v641, 0
        %649 = vmatprep.subr.mxu0 0.0
        %650 = vmatpush1.msra.mxu0 %v638
        %651 = vmatprep.subr.mxu0 0.0
        %652 = vmatpush1.msra.mxu0 %v639
        %653 = vmatprep.subr.mxu0 0.0
        %654 = vmatpush1.msra.mxu0 0.0
        %655 = vmatprep.subr.mxu0 0.0
        %656 = vmatpush1.msra.mxu0 0.0
        %657 = vmatprep.subr.mxu0 0.0
        %658 = vmatpush1.msra.mxu0 0.0
        %659 = vmatprep.subr.mxu0 0.0
        %660 = vmatpush1.msra.mxu0 0.0
        %661 = vmatprep.subr.mxu0 0.0
        %662 = vmatpush1.msra.mxu0 0.0
        %663 = vmatprep.subr.mxu0 0.0
        %664 = vmatpush1.msra.mxu0 0.0
        %665 = vmatprep.subr.mxu0 0.0
        %666 = vmatpush1.msra.mxu0 0.0
        %667 = vmatprep.subr.mxu0 0.0
        %668 = vmatpush1.msra.mxu0 0.0
        %669 = vmatprep.subr.mxu0 0.0
        %670 = vmatpush1.msra.mxu0 0.0
        %671 = vmatprep.subr.mxu0 0.0
        %672 = vmatpush1.msra.mxu0 0.0
        %673 = vmatprep.subr.mxu0 0.0
        %674 = vmatpush1.msra.mxu0 0.0
        %675 = vmatprep.subr.mxu0 0.0
        %676 = vmatpush1.msra.mxu0 0.0
        %677 = vmatprep.subr.mxu0 0.0
        %678 = vmatpush1.msra.mxu0 0.0
        %679 = vmatprep.subr.mxu0 0.0
        %680 = vmatpush1.msra.mxu0 0.0
        %681 = vmatprep.subr.mxu0 0.0
        %682 = vmatpush1.msra.mxu0 0.0
        %683 = vmatprep.subr.mxu0 0.0
        %684 = vmatpush1.msra.mxu0 0.0
        %685 = vmatprep.subr.mxu0 0.0
        %686 = vmatpush1.msra.mxu0 0.0
        %687 = vmatprep.subr.mxu0 0.0
        %688 = vmatpush1.msra.mxu0 0.0
        %689 = vmatprep.subr.mxu0 0.0
        %690 = vmatpush1.msra.mxu0 0.0
        %691 = vmatprep.subr.mxu0 0.0
        %692 = vmatpush1.msra.mxu0 0.0
        %693 = vmatprep.subr.mxu0 0.0
        %694 = vmatpush1.msra.mxu0 0.0
        %695 = vmatprep.subr.mxu0 0.0
        %696 = vmatpush1.msra.mxu0 0.0
        %697 = vmatprep.subr.mxu0 0.0
        %698 = vmatpush1.msra.mxu0 0.0
        %699 = vmatprep.subr.mxu0 0.0
        %700 = vmatpush1.msra.mxu0 0.0
        %701 = vmatprep.subr.mxu0 0.0
        %702 = vmatpush1.msra.mxu0 0.0
        %703 = vmatprep.subr.mxu0 0.0
        %704 = vmatpush1.msra.mxu0 0.0
        %705 = vmatprep.subr.mxu0 0.0
        %706 = vmatpush1.msra.mxu0 0.0
        %707 = vmatprep.subr.mxu0 0.0
        %708 = vmatpush1.msra.mxu0 0.0
        %709 = vmatprep.subr.mxu0 0.0
        %710 = vmatpush1.msra.mxu0 0.0
        %711 = vmatprep.subr.mxu0 0.0
        %712 = vmatpush1.msra.mxu0 0.0
        %713 = vmatprep.mubr.f32.mxu0 0.0
        %714 = vmatmul.mubr.f32.gmra.mrb[0].mxu0 %v644
        %v715 = vpop.f32.mrb[0].mxu0
        %v716 = vadd.f32 0.0, %v715
        %v717 = vpop.f32.mrb[0].mxu0
        %718 = vmatprep.mubr.f32.mxu0 0.0
        %719 = vmatmul.mubr.f32.gmra.mrb[0].mxu0 %v647
        %v720 = vpop.f32.mrb[0].mxu0
        %v721 = vadd.f32 0.0, %v720
        %v722 = vpop.f32.mrb[0].mxu0
        %723 = vdwg.mxu0
        %v724 = vld [vmem:[#allocation5] sm:$0xff]
        %v725 = vld [vmem:[#allocation5 + $0x8] sm:$0xff]
        %v726 = vld [vmem:[#allocation5 + $0x10] sm:$0xff]
        %v727 = vld [vmem:[#allocation5 + $0x18] sm:$0xff]
        %v728 = vld [vmem:[#allocation5 + $0x20] sm:$0xff]
        %v729 = vld [vmem:[#allocation5 + $0x28] sm:$0xff]
        %v730 = vld [vmem:[#allocation5 + $0x30] sm:$0xff]
        %v731 = vld [vmem:[#allocation5 + $0x38] sm:$0xff]
        %v732 = vld [vmem:[#allocation5 + $0x40] sm:$0xff]
        %v733 = vld [vmem:[#allocation5 + $0x48] sm:$0xff]
        %v734 = vld [vmem:[#allocation5 + $0x50] sm:$0xff]
        %v735 = vld [vmem:[#allocation5 + $0x58] sm:$0xff]
        %v736 = vld [vmem:[#allocation5 + $0x60] sm:$0xff]
        %v737 = vld [vmem:[#allocation5 + $0x68] sm:$0xff]
        %v738 = vld [vmem:[#allocation5 + $0x70] sm:$0xff]
        %v739 = vld [vmem:[#allocation5 + $0x78] sm:$0xff]
        %s740 = scalar_lea.vmem [#allocation5], 128
        %v741 = vld [vmem:[%s740] sm:$0xff]
        %v742 = vld [vmem:[%s740 + $0x8] sm:$0xff]
        %v743 = vld [vmem:[%s740 + $0x10] sm:$0xff]
        %v744 = vld [vmem:[%s740 + $0x18] sm:$0xff]
        %v745 = vld [vmem:[%s740 + $0x20] sm:$0xff]
        %v746 = vld [vmem:[%s740 + $0x28] sm:$0xff]
        %v747 = vld [vmem:[%s740 + $0x30] sm:$0xff]
        %v748 = vld [vmem:[%s740 + $0x38] sm:$0xff]
        %v749 = vld [vmem:[%s740 + $0x40] sm:$0xff]
        %v750 = vld [vmem:[%s740 + $0x48] sm:$0xff]
        %v751 = vld [vmem:[%s740 + $0x50] sm:$0xff]
        %v752 = vld [vmem:[%s740 + $0x58] sm:$0xff]
        %v753 = vld [vmem:[%s740 + $0x60] sm:$0xff]
        %v754 = vld [vmem:[%s740 + $0x68] sm:$0xff]
        %v755 = vld [vmem:[%s740 + $0x70] sm:$0xff]
        %v756 = vld [vmem:[%s740 + $0x78] sm:$0xff]
        %757 = vmatprep.subr.mxu0 0.0
        %758 = vmatpush1.msra.mxu0 %v741
        %759 = vmatprep.subr.mxu0 0.0
        %760 = vmatpush1.msra.mxu0 %v742
        %761 = vmatprep.subr.mxu0 0.0
        %762 = vmatpush1.msra.mxu0 %v743
        %763 = vmatprep.subr.mxu0 0.0
        %764 = vmatpush1.msra.mxu0 %v744
        %765 = vmatprep.subr.mxu0 0.0
        %766 = vmatpush1.msra.mxu0 %v745
        %767 = vmatprep.subr.mxu0 0.0
        %768 = vmatpush1.msra.mxu0 %v746
        %769 = vmatprep.subr.mxu0 0.0
        %770 = vmatpush1.msra.mxu0 %v747
        %771 = vmatprep.subr.mxu0 0.0
        %772 = vmatpush1.msra.mxu0 %v748
        %773 = vmatprep.subr.mxu0 0.0
        %774 = vmatpush1.msra.mxu0 %v749
        %775 = vmatprep.subr.mxu0 0.0
        %776 = vmatpush1.msra.mxu0 %v750
        %777 = vmatprep.subr.mxu0 0.0
        %778 = vmatpush1.msra.mxu0 %v751
        %779 = vmatprep.subr.mxu0 0.0
        %780 = vmatpush1.msra.mxu0 %v752
        %781 = vmatprep.subr.mxu0 0.0
        %782 = vmatpush1.msra.mxu0 %v753
        %783 = vmatprep.subr.mxu0 0.0
        %784 = vmatpush1.msra.mxu0 %v754
        %785 = vmatprep.subr.mxu0 0.0
        %786 = vmatpush1.msra.mxu0 %v755
        %787 = vmatprep.subr.mxu0 0.0
        %788 = vmatpush1.msra.mxu0 %v756
        %789 = vmatprep.subr.mxu0 0.0
        %790 = vmatpush1.msra.mxu0 0.0
        %791 = vmatprep.subr.mxu0 0.0
        %792 = vmatpush1.msra.mxu0 0.0
        %793 = vmatprep.subr.mxu0 0.0
        %794 = vmatpush1.msra.mxu0 0.0
        %795 = vmatprep.subr.mxu0 0.0
        %796 = vmatpush1.msra.mxu0 0.0
        %797 = vmatprep.subr.mxu0 0.0
        %798 = vmatpush1.msra.mxu0 0.0
        %799 = vmatprep.subr.mxu0 0.0
        %800 = vmatpush1.msra.mxu0 0.0
        %801 = vmatprep.subr.mxu0 0.0
        %802 = vmatpush1.msra.mxu0 0.0
        %803 = vmatprep.subr.mxu0 0.0
        %804 = vmatpush1.msra.mxu0 0.0
        %805 = vmatprep.subr.mxu0 0.0
        %806 = vmatpush1.msra.mxu0 0.0
        %807 = vmatprep.subr.mxu0 0.0
        %808 = vmatpush1.msra.mxu0 0.0
        %809 = vmatprep.subr.mxu0 0.0
        %810 = vmatpush1.msra.mxu0 0.0
        %811 = vmatprep.subr.mxu0 0.0
        %812 = vmatpush1.msra.mxu0 0.0
        %813 = vmatprep.subr.mxu0 0.0
        %814 = vmatpush1.msra.mxu0 0.0
        %815 = vmatprep.subr.mxu0 0.0
        %816 = vmatpush1.msra.mxu0 0.0
        %817 = vmatprep.subr.mxu0 0.0
        %818 = vmatpush1.msra.mxu0 0.0
        %819 = vmatprep.subr.mxu0 0.0
        %820 = vmatpush1.msra.mxu0 0.0
        %821 = vmatprep.mubr.f32.mxu0 0.0
        %822 = vmatmul.mubr.f32.gmra.mrb[0].mxu0 %v638
        %v823 = vpop.f32.mrb[0].mxu0
        %v824 = vadd.f32 0.0, %v823
        %v825 = vpop.f32.mrb[0].mxu0
        %826 = vmatprep.mubr.f32.mxu0 0.0
        %827 = vmatmul.mubr.f32.gmra.mrb[0].mxu0 %v639
        %v828 = vpop.f32.mrb[0].mxu0
        %v829 = vadd.f32 0.0, %v828
        %v830 = vpop.f32.mrb[0].mxu0
        %831 = vdwg.mxu0
        %832 = vmatprep.subr.mxu0 0.0
        %833 = vmatpush1.msra.mxu0 %v724
        %834 = vmatprep.subr.mxu0 0.0
        %835 = vmatpush1.msra.mxu0 %v725
        %836 = vmatprep.subr.mxu0 0.0
        %837 = vmatpush1.msra.mxu0 %v726
        %838 = vmatprep.subr.mxu0 0.0
        %839 = vmatpush1.msra.mxu0 %v727
        %840 = vmatprep.subr.mxu0 0.0
        %841 = vmatpush1.msra.mxu0 %v728
        %842 = vmatprep.subr.mxu0 0.0
        %843 = vmatpush1.msra.mxu0 %v729
        %844 = vmatprep.subr.mxu0 0.0
        %845 = vmatpush1.msra.mxu0 %v730
        %846 = vmatprep.subr.mxu0 0.0
        %847 = vmatpush1.msra.mxu0 %v731
        %848 = vmatprep.subr.mxu0 0.0
        %849 = vmatpush1.msra.mxu0 %v732
        %850 = vmatprep.subr.mxu0 0.0
        %851 = vmatpush1.msra.mxu0 %v733
        %852 = vmatprep.subr.mxu0 0.0
        %853 = vmatpush1.msra.mxu0 %v734
        %854 = vmatprep.subr.mxu0 0.0
        %855 = vmatpush1.msra.mxu0 %v735
        %856 = vmatprep.subr.mxu0 0.0
        %857 = vmatpush1.msra.mxu0 %v736
        %858 = vmatprep.subr.mxu0 0.0
        %859 = vmatpush1.msra.mxu0 %v737
        %860 = vmatprep.subr.mxu0 0.0
        %861 = vmatpush1.msra.mxu0 %v738
        %862 = vmatprep.subr.mxu0 0.0
        %863 = vmatpush1.msra.mxu0 %v739
        %864 = vmatprep.subr.mxu0 0.0
        %865 = vmatpush1.msra.mxu0 0.0
        %866 = vmatprep.subr.mxu0 0.0
        %867 = vmatpush1.msra.mxu0 0.0
        %868 = vmatprep.subr.mxu0 0.0
        %869 = vmatpush1.msra.mxu0 0.0
        %870 = vmatprep.subr.mxu0 0.0
        %871 = vmatpush1.msra.mxu0 0.0
        %872 = vmatprep.subr.mxu0 0.0
        %873 = vmatpush1.msra.mxu0 0.0
        %874 = vmatprep.subr.mxu0 0.0
        %875 = vmatpush1.msra.mxu0 0.0
        %876 = vmatprep.subr.mxu0 0.0
        %877 = vmatpush1.msra.mxu0 0.0
        %878 = vmatprep.subr.mxu0 0.0
        %879 = vmatpush1.msra.mxu0 0.0
        %880 = vmatprep.subr.mxu0 0.0
        %881 = vmatpush1.msra.mxu0 0.0
        %882 = vmatprep.subr.mxu0 0.0
        %883 = vmatpush1.msra.mxu0 0.0
        %884 = vmatprep.subr.mxu0 0.0
        %885 = vmatpush1.msra.mxu0 0.0
        %886 = vmatprep.subr.mxu0 0.0
        %887 = vmatpush1.msra.mxu0 0.0
        %888 = vmatprep.subr.mxu0 0.0
        %889 = vmatpush1.msra.mxu0 0.0
        %890 = vmatprep.subr.mxu0 0.0
        %891 = vmatpush1.msra.mxu0 0.0
        %892 = vmatprep.subr.mxu0 0.0
        %893 = vmatpush1.msra.mxu0 0.0
        %894 = vmatprep.subr.mxu0 0.0
        %895 = vmatpush1.msra.mxu0 0.0
        %896 = vmatprep.mubr.f32.mxu0 0.0
        %897 = vmatmul.mubr.f32.gmra.mrb[0].mxu0 %v716
        %v898 = vpop.f32.mrb[0].mxu0
        %v899 = vadd.f32 %v824, %v898
        %v900 = vpop.f32.mrb[0].mxu0
        %901 = vmatprep.mubr.f32.mxu0 0.0
        %902 = vmatmul.mubr.f32.gmra.mrb[0].mxu0 %v721
        %v903 = vpop.f32.mrb[0].mxu0
        %v904 = vadd.f32 %v829, %v903
        %v905 = vpop.f32.mrb[0].mxu0
        %906 = vdwg.mxu0
        %s907 = scalar_lea.vmem [#allocation7], 32
        %v908 = vld [vmem:[%s907] sm:$0xff]
        %v909 = vld [vmem:[%s907 + $0x8] sm:$0xff]
        %v911 = vsel %vm642, %v908, 0
        %v914 = vsel %vm642, %v909, 0
        %916 = vmatprep.subr.mxu0 0.0
        %917 = vmatpush1.msra.mxu0 %v638
        %918 = vmatprep.subr.mxu0 0.0
        %919 = vmatpush1.msra.mxu0 %v639
        %920 = vmatprep.subr.mxu0 0.0
        %921 = vmatpush1.msra.mxu0 0.0
        %922 = vmatprep.subr.mxu0 0.0
        %923 = vmatpush1.msra.mxu0 0.0
        %924 = vmatprep.subr.mxu0 0.0
        %925 = vmatpush1.msra.mxu0 0.0
        %926 = vmatprep.subr.mxu0 0.0
        %927 = vmatpush1.msra.mxu0 0.0
        %928 = vmatprep.subr.mxu0 0.0
        %929 = vmatpush1.msra.mxu0 0.0
        %930 = vmatprep.subr.mxu0 0.0
        %931 = vmatpush1.msra.mxu0 0.0
        %932 = vmatprep.subr.mxu0 0.0
        %933 = vmatpush1.msra.mxu0 0.0
        %934 = vmatprep.subr.mxu0 0.0
        %935 = vmatpush1.msra.mxu0 0.0
        %936 = vmatprep.subr.mxu0 0.0
        %937 = vmatpush1.msra.mxu0 0.0
        %938 = vmatprep.subr.mxu0 0.0
        %939 = vmatpush1.msra.mxu0 0.0
        %940 = vmatprep.subr.mxu0 0.0
        %941 = vmatpush1.msra.mxu0 0.0
        %942 = vmatprep.subr.mxu0 0.0
        %943 = vmatpush1.msra.mxu0 0.0
        %944 = vmatprep.subr.mxu0 0.0
        %945 = vmatpush1.msra.mxu0 0.0
        %946 = vmatprep.subr.mxu0 0.0
        %947 = vmatpush1.msra.mxu0 0.0
        %948 = vmatprep.subr.mxu0 0.0
        %949 = vmatpush1.msra.mxu0 0.0
        %950 = vmatprep.subr.mxu0 0.0
        %951 = vmatpush1.msra.mxu0 0.0
        %952 = vmatprep.subr.mxu0 0.0
        %953 = vmatpush1.msra.mxu0 0.0
        %954 = vmatprep.subr.mxu0 0.0
        %955 = vmatpush1.msra.mxu0 0.0
        %956 = vmatprep.subr.mxu0 0.0
        %957 = vmatpush1.msra.mxu0 0.0
        %958 = vmatprep.subr.mxu0 0.0
        %959 = vmatpush1.msra.mxu0 0.0
        %960 = vmatprep.subr.mxu0 0.0
        %961 = vmatpush1.msra.mxu0 0.0
        %962 = vmatprep.subr.mxu0 0.0
        %963 = vmatpush1.msra.mxu0 0.0
        %964 = vmatprep.subr.mxu0 0.0
        %965 = vmatpush1.msra.mxu0 0.0
        %966 = vmatprep.subr.mxu0 0.0
        %967 = vmatpush1.msra.mxu0 0.0
        %968 = vmatprep.subr.mxu0 0.0
        %969 = vmatpush1.msra.mxu0 0.0
        %970 = vmatprep.subr.mxu0 0.0
        %971 = vmatpush1.msra.mxu0 0.0
        %972 = vmatprep.subr.mxu0 0.0
        %973 = vmatpush1.msra.mxu0 0.0
        %974 = vmatprep.subr.mxu0 0.0
        %975 = vmatpush1.msra.mxu0 0.0
        %976 = vmatprep.subr.mxu0 0.0
        %977 = vmatpush1.msra.mxu0 0.0
        %978 = vmatprep.subr.mxu0 0.0
        %979 = vmatpush1.msra.mxu0 0.0
        %980 = vmatprep.mubr.f32.mxu0 0.0
        %981 = vmatmul.mubr.f32.gmra.mrb[0].mxu0 %v911
        %v982 = vpop.f32.mrb[0].mxu0
        %v983 = vadd.f32 0.0, %v982
        %v984 = vpop.f32.mrb[0].mxu0
        %985 = vmatprep.mubr.f32.mxu0 0.0
        %986 = vmatmul.mubr.f32.gmra.mrb[0].mxu0 %v914
        %v987 = vpop.f32.mrb[0].mxu0
        %v988 = vadd.f32 0.0, %v987
        %v989 = vpop.f32.mrb[0].mxu0
        %990 = vdwg.mxu0
        %s991 = scalar_lea.vmem [#allocation5], 256
        %v992 = vld [vmem:[%s991] sm:$0xff]
        %v993 = vld [vmem:[%s991 + $0x8] sm:$0xff]
        %v994 = vld [vmem:[%s991 + $0x10] sm:$0xff]
        %v995 = vld [vmem:[%s991 + $0x18] sm:$0xff]
        %v996 = vld [vmem:[%s991 + $0x20] sm:$0xff]
        %v997 = vld [vmem:[%s991 + $0x28] sm:$0xff]
        %v998 = vld [vmem:[%s991 + $0x30] sm:$0xff]
        %v999 = vld [vmem:[%s991 + $0x38] sm:$0xff]
        %v1000 = vld [vmem:[%s991 + $0x40] sm:$0xff]
        %v1001 = vld [vmem:[%s991 + $0x48] sm:$0xff]
        %v1002 = vld [vmem:[%s991 + $0x50] sm:$0xff]
        %v1003 = vld [vmem:[%s991 + $0x58] sm:$0xff]
        %v1004 = vld [vmem:[%s991 + $0x60] sm:$0xff]
        %v1005 = vld [vmem:[%s991 + $0x68] sm:$0xff]
        %v1006 = vld [vmem:[%s991 + $0x70] sm:$0xff]
        %v1007 = vld [vmem:[%s991 + $0x78] sm:$0xff]
        %1008 = vmatprep.subr.mxu0 0.0
        %1009 = vmatpush1.msra.mxu0 %v992
        %1010 = vmatprep.subr.mxu0 0.0
        %1011 = vmatpush1.msra.mxu0 %v993
        %1012 = vmatprep.subr.mxu0 0.0
        %1013 = vmatpush1.msra.mxu0 %v994
        %1014 = vmatprep.subr.mxu0 0.0
        %1015 = vmatpush1.msra.mxu0 %v995
        %1016 = vmatprep.subr.mxu0 0.0
        %1017 = vmatpush1.msra.mxu0 %v996
        %1018 = vmatprep.subr.mxu0 0.0
        %1019 = vmatpush1.msra.mxu0 %v997
        %1020 = vmatprep.subr.mxu0 0.0
        %1021 = vmatpush1.msra.mxu0 %v998
        %1022 = vmatprep.subr.mxu0 0.0
        %1023 = vmatpush1.msra.mxu0 %v999
        %1024 = vmatprep.subr.mxu0 0.0
        %1025 = vmatpush1.msra.mxu0 %v1000
        %1026 = vmatprep.subr.mxu0 0.0
        %1027 = vmatpush1.msra.mxu0 %v1001
        %1028 = vmatprep.subr.mxu0 0.0
        %1029 = vmatpush1.msra.mxu0 %v1002
        %1030 = vmatprep.subr.mxu0 0.0
        %1031 = vmatpush1.msra.mxu0 %v1003
        %1032 = vmatprep.subr.mxu0 0.0
        %1033 = vmatpush1.msra.mxu0 %v1004
        %1034 = vmatprep.subr.mxu0 0.0
        %1035 = vmatpush1.msra.mxu0 %v1005
        %1036 = vmatprep.subr.mxu0 0.0
        %1037 = vmatpush1.msra.mxu0 %v1006
        %1038 = vmatprep.subr.mxu0 0.0
        %1039 = vmatpush1.msra.mxu0 %v1007
        %1040 = vmatprep.subr.mxu0 0.0
        %1041 = vmatpush1.msra.mxu0 0.0
        %1042 = vmatprep.subr.mxu0 0.0
        %1043 = vmatpush1.msra.mxu0 0.0
        %1044 = vmatprep.subr.mxu0 0.0
        %1045 = vmatpush1.msra.mxu0 0.0
        %1046 = vmatprep.subr.mxu0 0.0
        %1047 = vmatpush1.msra.mxu0 0.0
        %1048 = vmatprep.subr.mxu0 0.0
        %1049 = vmatpush1.msra.mxu0 0.0
        %1050 = vmatprep.subr.mxu0 0.0
        %1051 = vmatpush1.msra.mxu0 0.0
        %1052 = vmatprep.subr.mxu0 0.0
        %1053 = vmatpush1.msra.mxu0 0.0
        %1054 = vmatprep.subr.mxu0 0.0
        %1055 = vmatpush1.msra.mxu0 0.0
        %1056 = vmatprep.subr.mxu0 0.0
        %1057 = vmatpush1.msra.mxu0 0.0
        %1058 = vmatprep.subr.mxu0 0.0
        %1059 = vmatpush1.msra.mxu0 0.0
        %1060 = vmatprep.subr.mxu0 0.0
        %1061 = vmatpush1.msra.mxu0 0.0
        %1062 = vmatprep.subr.mxu0 0.0
        %1063 = vmatpush1.msra.mxu0 0.0
        %1064 = vmatprep.subr.mxu0 0.0
        %1065 = vmatpush1.msra.mxu0 0.0
        %1066 = vmatprep.subr.mxu0 0.0
        %1067 = vmatpush1.msra.mxu0 0.0
        %1068 = vmatprep.subr.mxu0 0.0
        %1069 = vmatpush1.msra.mxu0 0.0
        %1070 = vmatprep.subr.mxu0 0.0
        %1071 = vmatpush1.msra.mxu0 0.0
        %1072 = vmatprep.mubr.f32.mxu0 0.0
        %1073 = vmatmul.mubr.f32.gmra.mrb[0].mxu0 %v983
        %v1074 = vpop.f32.mrb[0].mxu0
        %v1075 = vadd.f32 0.0, %v1074
        %v1076 = vpop.f32.mrb[0].mxu0
        %1077 = vmatprep.mubr.f32.mxu0 0.0
        %1078 = vmatmul.mubr.f32.gmra.mrb[0].mxu0 %v988
        %v1079 = vpop.f32.mrb[0].mxu0
        %v1080 = vadd.f32 0.0, %v1079
        %v1081 = vpop.f32.mrb[0].mxu0
        %1082 = vdwg.mxu0
        %v1083 = vadd.f32 %v899, %v1075
        %v1084 = vadd.f32 %v904, %v1080
        %v1085 = vld [vmem:[%s5] sm:$0xff]
        %v1086 = vld [vmem:[%s5 + $0x8] sm:$0xff]
        %v1087 = vld [vmem:[%s5 + $0x10] sm:$0xff]
        %v1088 = vld [vmem:[%s5 + $0x18] sm:$0xff]
        %v1089 = vld [vmem:[%s5 + $0x20] sm:$0xff]
        %v1090 = vld [vmem:[%s5 + $0x28] sm:$0xff]
        %v1091 = vld [vmem:[%s5 + $0x30] sm:$0xff]
        %v1092 = vld [vmem:[%s5 + $0x38] sm:$0xff]
        %v1093 = vld [vmem:[%s5 + $0x40] sm:$0xff]
        %1094 = vmatprep.subr.mxu0 0.0
        %1095 = vmatpush1.msra.mxu0 %v1085
        %1096 = vmatprep.subr.mxu0 0.0
        %1097 = vmatpush1.msra.mxu0 %v1086
        %1098 = vmatprep.subr.mxu0 0.0
        %1099 = vmatpush1.msra.mxu0 %v1087
        %1100 = vmatprep.subr.mxu0 0.0
        %1101 = vmatpush1.msra.mxu0 %v1088
        %1102 = vmatprep.subr.mxu0 0.0
        %1103 = vmatpush1.msra.mxu0 %v1089
        %1104 = vmatprep.subr.mxu0 0.0
        %1105 = vmatpush1.msra.mxu0 %v1090
        %1106 = vmatprep.subr.mxu0 0.0
        %1107 = vmatpush1.msra.mxu0 %v1091
        %1108 = vmatprep.subr.mxu0 0.0
        %1109 = vmatpush1.msra.mxu0 %v1092
        %1110 = vmatprep.subr.mxu0 0.0
        %1111 = vmatpush1.msra.mxu0 %v1093
        %1112 = vmatprep.subr.mxu0 0.0
        %1113 = vmatpush1.msra.mxu0 0.0
        %1114 = vmatprep.subr.mxu0 0.0
        %1115 = vmatpush1.msra.mxu0 0.0
        %1116 = vmatprep.subr.mxu0 0.0
        %1117 = vmatpush1.msra.mxu0 0.0
        %1118 = vmatprep.subr.mxu0 0.0
        %1119 = vmatpush1.msra.mxu0 0.0
        %1120 = vmatprep.subr.mxu0 0.0
        %1121 = vmatpush1.msra.mxu0 0.0
        %1122 = vmatprep.subr.mxu0 0.0
        %1123 = vmatpush1.msra.mxu0 0.0
        %1124 = vmatprep.subr.mxu0 0.0
        %1125 = vmatpush1.msra.mxu0 0.0
        %1126 = vmatprep.subr.mxu0 0.0
        %1127 = vmatpush1.msra.mxu0 0.0
        %1128 = vmatprep.subr.mxu0 0.0
        %1129 = vmatpush1.msra.mxu0 0.0
        %1130 = vmatprep.subr.mxu0 0.0
        %1131 = vmatpush1.msra.mxu0 0.0
        %1132 = vmatprep.subr.mxu0 0.0
        %1133 = vmatpush1.msra.mxu0 0.0
        %1134 = vmatprep.subr.mxu0 0.0
        %1135 = vmatpush1.msra.mxu0 0.0
        %1136 = vmatprep.subr.mxu0 0.0
        %1137 = vmatpush1.msra.mxu0 0.0
        %1138 = vmatprep.subr.mxu0 0.0
        %1139 = vmatpush1.msra.mxu0 0.0
        %1140 = vmatprep.subr.mxu0 0.0
        %1141 = vmatpush1.msra.mxu0 0.0
        %1142 = vmatprep.subr.mxu0 0.0
        %1143 = vmatpush1.msra.mxu0 0.0
        %1144 = vmatprep.subr.mxu0 0.0
        %1145 = vmatpush1.msra.mxu0 0.0
        %1146 = vmatprep.subr.mxu0 0.0
        %1147 = vmatpush1.msra.mxu0 0.0
        %1148 = vmatprep.subr.mxu0 0.0
        %1149 = vmatpush1.msra.mxu0 0.0
        %1150 = vmatprep.subr.mxu0 0.0
        %1151 = vmatpush1.msra.mxu0 0.0
        %1152 = vmatprep.subr.mxu0 0.0
        %1153 = vmatpush1.msra.mxu0 0.0
        %1154 = vmatprep.subr.mxu0 0.0
        %1155 = vmatpush1.msra.mxu0 0.0
        %1156 = vmatprep.subr.mxu0 0.0
        %1157 = vmatpush1.msra.mxu0 0.0
        %1158 = vmatprep.mubr.f32.mxu0 0.0
        %1159 = vmatmul.mubr.f32.gmra.mrb[0].mxu0 %v373
        %v1160 = vpop.f32.mrb[0].mxu0
        %v1161 = vadd.f32 0.0, %v1160
        %v1162 = vpop.f32.mrb[0].mxu0
        %1163 = vmatprep.mubr.f32.mxu0 0.0
        %1164 = vmatmul.mubr.f32.gmra.mrb[0].mxu0 %v376
        %v1165 = vpop.f32.mrb[0].mxu0
        %v1166 = vadd.f32 0.0, %v1165
        %v1167 = vpop.f32.mrb[0].mxu0
        %1168 = vdwg.mxu0
        %v1169 = vld [vmem:[%s4] sm:$0x1]
        %v1171 = vlaneseq
        %v1172 = vshrl.u32 %v1171, 7
        %v1173 = vsub.s32 0, %v1172
        %v1174 = vrot.slane %v1169, %v1173
        %v1176 = vadd.f32 %v1083, %v1174
        %v1177 = vadd.f32 %v1084, %v1174
        %v1178 = vadd.f32 %v1176, %v1161
        %v1179 = vadd.f32 %v1177, %v1166
        %v1180 = vld [vmem:[%s6] sm:$0x1]
        %v1182 = vlaneseq
        %v1183 = vshrl.u32 %v1182, 7
        %v1184 = vsub.s32 0, %v1183
        %v1185 = vrot.slane %v1180, %v1184
        %v1187 = vadd.f32 %v1178, %v1185
        %v1188 = vadd.f32 %v1179, %v1185
        %v1189 = vmax.f32 %v1187, 0.0
        %v1190 = vmax.f32 %v1188, 0.0
        %1191 = vst [vmem:[%s342] sm:$0xff] %v1189
        %1192 = vst [vmem:[%s342 + $0x8] sm:$0xff] %v1190
        %s1193 = sand.u32 %s205, 1
        %s1194 = scalar_lea.sflag [#allocation4], %s1193
        %s1195 = sand.u32 %s205, 1
        %s1196 = smul.addr %s1195, 16
        %s1197 = scalar_lea.vmem [#allocation8], %s1196
        // Predicated region
        $region65: #{tpu_custom_call.1} parent=51 // pred_check
          %p1198 = pneg %p215
        $region66: #{tpu_custom_call.1} parent=51 // pred_check_branch
          %1200 = sbr.rel (%p1198) target = $region68
        $region67: #{tpu_custom_call.1} parent=51 // pred_region
          %s1202 = ssub.s32 256, 256
          %1203 = vsyncadd %s1194, %s1202
          %s1204 = smul.addr %s24, 2
          %s1205 = smul.addr %s1204, 128
          %s1206 = scalar_lea.hbm %s8, %s1205
          %s1207 = sshll.u32 %s1197, 4
          %s1208 = int_to_ptr.vmem [resolvable:$true] %s1207
          %1213 = dma.vmem_to_hbm [thread:$0]  %s1208, 256, %s1206, %s1194, 128, 128, 8
        $region68: #{tpu_custom_call.1} parent=51 // pred_fallthru
          _
      $region52: #{tpu_custom_call.1} parent=5 // pred_fallthru
        _
      %p1214 = scmp.le.s32.totalorder 2, %s19
      // Predicated region
      $region69: #{tpu_custom_call.1} parent=5 // pred_check
        %p1215 = pneg %p1214
      $region70: #{tpu_custom_call.1} parent=5 // pred_check_branch
        %1217 = sbr.rel (%p1215) target = $region72
      $region71: #{tpu_custom_call.1} parent=5 // pred_region
        %s1218 = ssub.s32 %s19, 2
        // Predicated region
        $region73: #{tpu_custom_call.1} parent=71 // pred_check
          %p1219 = pneg %p221
        $region74: #{tpu_custom_call.1} parent=71 // pred_check_branch
          %1221 = sbr.rel (%p1219) target = $region76
        $region75: #{tpu_custom_call.1} parent=71 // pred_region
          %s1222 = sand.u32 %s206, 1
          %s1223 = scalar_lea.sflag [#allocation4], %s1222
          %s1224 = sand.u32 %s206, 1
          %s1225 = smul.addr %s1224, 16
          %s1226 = scalar_lea.vmem [#allocation8], %s1225
          %1227 = dma.done %s1223, 256
        $region76: #{tpu_custom_call.1} parent=71 // pred_fallthru
          _
      $region72: #{tpu_custom_call.1} parent=5 // pred_fallthru
        _
    $region6: #{tpu_custom_call.1} parent=1 // loop_footer
      %s23 = sadd.s32 1, %s19
    $region7: #{tpu_custom_call.1} parent=1 // loop_footer_branch
      %18 = sbr.rel target = $region3
    $region8: #{tpu_custom_call.1} parent=1 // loop_exit
      _
    %1228 = vsyncpa [#allocation3], 1
    %s1229 = scalar_lea.sflag [#allocation3], 1
    %1230 = vsyncpa %s1229, 1
    %1231 = vsyncpa [#allocation6], 1
    %1232 = vsyncpa [#allocation4], 1
    %s1233 = scalar_lea.sflag [#allocation4], 1
    %1234 = vsyncpa %s1233, 1

</llo_original>
